<compile_context>
chip_gen: v5e
topology: v5e:2x2
jax: 0.10.0
libtpu: 0.0.40
codegen_flags: <defaults>
</compile_context>

<pallas_src>
import functools

import jax
import jax.numpy as jnp
from jax import lax
from jax.experimental import pallas as pl
from jax.experimental.pallas import tpu as pltpu


# ---------------------------------------------------------------------------
# Fused kernel: implicit-im2col conv + train-mode BatchNorm (two-pass) + ReLU
# ---------------------------------------------------------------------------
def _conv_bn_relu_kernel(x_ref, w_ref, g_ref, b_ref, o_ref, *,
                         nb, kh, kw, oh, ow, stride, dilation, eps, use_bf16):
    # Single grid step over the whole batch block:
    #   x_ref : (NB, Hp, Wp, Cin)      padded NHWC batch block
    #   w_ref : (KH*KW, Cout, Cin)     conv weight taps
    #   g_ref, b_ref : (Cout, 1)       BN affine params
    #   o_ref : (NB, Cout, OH*OW)      lane-dense output (reshapes to NCHW)
    m = oh * ow
    nm = nb * m
    cin = x_ref.shape[-1]
    cout = w_ref.shape[1]

    # Implicit im2col: for each kernel tap (i, j), take the shifted window across
    # the WHOLE batch block, flatten (NB, OH, OW, Cin) -> (NB*M, Cin) (leading-dim
    # collapse only; minor dim Cin untouched) and contract Cin on the MXU against
    # the (Cout, Cin) weight slice, accumulating directly in (Cout, NB*M) layout.
    acc = jnp.zeros((cout, nm), jnp.float32)
    for i in range(kh):
        for j in range(kw):
            r0 = i * dilation
            c0 = j * dilation
            if stride == 1:
                sl = x_ref[:, r0:r0 + oh, c0:c0 + ow, :]
            else:
                sl = x_ref[:, r0:r0 + (oh - 1) * stride + 1:stride,
                           c0:c0 + (ow - 1) * stride + 1:stride, :]
            sl = sl.reshape(nm, cin)                      # (NB*M, Cin)
            w_tap = w_ref[i * kw + j]                     # (Cout, Cin)
            if use_bf16:
                sl = sl.astype(jnp.bfloat16)
                w_tap = w_tap.astype(jnp.bfloat16)
            acc = acc + lax.dot_general(
                w_tap, sl,
                (((1,), (1,)), ((), ())),                 # contract Cin
                preferred_element_type=jnp.float32)       # (Cout, NB*M), f32 acc

    # Train-mode BatchNorm over (batch, spatial), two-pass (numerically safe) variance.
    inv_count = 1.0 / float(nm)
    mean = jnp.sum(acc, axis=1, keepdims=True) * inv_count        # (Cout, 1)
    centered = acc - mean
    var = jnp.sum(centered * centered, axis=1, keepdims=True) * inv_count
    inv_std = lax.rsqrt(var + eps)
    scale = g_ref[...] * inv_std                                   # (Cout, 1)
    y = jnp.maximum(centered * scale + b_ref[...], 0.0)           # BN + ReLU

    # Store per image: lane-aligned (multiples of M=OH*OW) slices of the (Cout, NB*M)
    # result into the (NB, Cout, M) output block.  Written exactly once.
    for b in range(nb):
        o_ref[b] = y[:, b * m:(b + 1) * m]


# ---------------------------------------------------------------------------
# Wrapper (NCHW in / NCHW out, PyTorch convention)
# ---------------------------------------------------------------------------
def conv2d_bn_relu(x_nchw, weight, bias, gamma, beta, *,
                   stride=1, padding=1, dilation=1, groups=1, eps=1e-4,
                   use_bf16_matmul=False):
    # TODO(synk): grouped conv (groups > 1) not implemented; config uses groups=1.
    assert groups == 1
    del bias  # conv bias cancels exactly under train-mode BatchNorm (acc - mean)

    batch, cin, h, w = x_nchw.shape
    cout, cin_w, kh, kw = weight.shape
    assert cin_w == cin
    oh = (h + 2 * padding - dilation * (kh - 1) - 1) // stride + 1
    ow = (w + 2 * padding - dilation * (kw - 1) - 1) // stride + 1
    m = oh * ow
    hp, wp = h + 2 * padding, w + 2 * padding

    # One 1x-sized layout pass on the input (NCHW -> padded NHWC); output needs no
    # transpose at all (pure reshape below).
    x_nhwc = jnp.transpose(x_nchw, (0, 2, 3, 1)).astype(jnp.float32)
    x_pad = jnp.pad(x_nhwc, ((0, 0), (padding, padding), (padding, padding), (0, 0)))

    # (Cout, Cin, KH, KW) -> (KH*KW, Cout, Cin): one (Cout, Cin) slice per tap.
    w_taps = jnp.transpose(weight, (2, 3, 0, 1)).reshape(kh * kw, cout, cin)
    w_taps = w_taps.astype(jnp.float32)
    g2 = gamma.reshape(cout, 1).astype(jnp.float32)
    b2 = beta.reshape(cout, 1).astype(jnp.float32)

    kernel = functools.partial(
        _conv_bn_relu_kernel, nb=batch, kh=kh, kw=kw, oh=oh, ow=ow,
        stride=stride, dilation=dilation, eps=float(eps), use_bf16=use_bf16_matmul)

    conv_flops = 2 * batch * m * cout * cin * kh * kw
    bn_flops = 8 * batch * m * cout
    bytes_accessed = 4 * (x_pad.size + w_taps.size + g2.size + b2.size
                          + batch * cout * m)

    out_flat = pl.pallas_call(
        kernel,
        # Single grid step: whole batch in one block (overhead-bound config).
        # TODO(synk): for larger N / spatial sizes, tile batch & M and split into a
        #             stats pass + a "parallel" normalize pass (v7x dual-TC).
        grid=(1,),
        in_specs=[
            pl.BlockSpec((batch, hp, wp, cin), lambda i: (0, 0, 0, 0)),
            pl.BlockSpec((kh * kw, cout, cin), lambda i: (0, 0, 0)),
            pl.BlockSpec((cout, 1), lambda i: (0, 0)),
            pl.BlockSpec((cout, 1), lambda i: (0, 0)),
        ],
        out_specs=pl.BlockSpec((batch, cout, m), lambda i: (0, 0, 0)),
        out_shape=jax.ShapeDtypeStruct((batch, cout, m), jnp.float32),
        compiler_params=pltpu.CompilerParams(
            dimension_semantics=("arbitrary",),
            vmem_limit_bytes=32 * 1024 * 1024),
        cost_estimate=pl.CostEstimate(flops=conv_flops + bn_flops,
                                      transcendentals=cout,
                                      bytes_accessed=bytes_accessed),
    )(x_pad, w_taps, g2, b2)

    return out_flat.reshape(batch, cout, oh, ow)        # NCHW via pure reshape


# ---------------------------------------------------------------------------
# Pure-JAX reference (faithful to the PyTorch module, incl. conv bias)
# ---------------------------------------------------------------------------
def _reference(x_nchw, weight, bias, gamma, beta, *, stride, padding, dilation, eps):
    y = lax.conv_general_dilated(
        x_nchw, weight,
        window_strides=(stride, stride),
        padding=((padding, padding), (padding, padding)),
        rhs_dilation=(dilation, dilation),
        dimension_numbers=("NCHW", "OIHW", "NCHW"))
    y = y + bias[None, :, None, None]
    mean = jnp.mean(y, axis=(0, 2, 3), keepdims=True)
    var = jnp.mean((y - mean) ** 2, axis=(0, 2, 3), keepdims=True)
    y = (y - mean) * lax.rsqrt(var + eps)
    y = y * gamma[None, :, None, None] + beta[None, :, None, None]
    return jnp.maximum(y, 0.0)


if __name__ == "__main__":
    # config: num_inputs=4, num_outputs=8, kernel_size=3, stride=1, padding=1,
    #         dilation=1, groups=1
    N, C_IN, H, W = 2, 4, 16, 16
    C_OUT, KH, KW = 8, 3, 3
    STRIDE, PAD, DIL, EPS = 1, 1, 1, 1e-4

    key = jax.random.PRNGKey(0)
    kx, kw_, kb, kg, kbe = jax.random.split(key, 5)
    x = jax.random.normal(kx, (N, C_IN, H, W), dtype=jnp.float32)
    weight = jax.random.normal(kw_, (C_OUT, C_IN, KH, KW), dtype=jnp.float32) * 0.1
    bias = jax.random.normal(kb, (C_OUT,), dtype=jnp.float32) * 0.1
    gamma = 1.0 + 0.1 * jax.random.normal(kg, (C_OUT,), dtype=jnp.float32)
    beta = 0.1 * jax.random.normal(kbe, (C_OUT,), dtype=jnp.float32)

    fn = jax.jit(lambda xx, ww, bb, gg, be: conv2d_bn_relu(
        xx, ww, bb, gg, be, stride=STRIDE, padding=PAD, dilation=DIL, eps=EPS))
    out = fn(x, weight, bias, gamma, beta)
    out = jax.block_until_ready(out)

    ref = _reference(x, weight, bias, gamma, beta,
                     stride=STRIDE, padding=PAD, dilation=DIL, eps=EPS)
    assert out.shape == (N, C_OUT, H, W)
    assert jnp.allclose(out, ref, rtol=1e-4, atol=1e-4)

    print("KERNEL_OK")
</pallas_src>

<mosaic_0001>
module attributes {stable_mosaic.version = 11 : i64} {
  func.func @_conv_bn_relu_kernel(%arg0: i32, %arg1: memref<2x18x18x4xf32, #tpu.memory_space<vmem>>, %arg2: memref<9x8x4xf32, #tpu.memory_space<vmem>>, %arg3: memref<8x1xf32, #tpu.memory_space<vmem>>, %arg4: memref<8x1xf32, #tpu.memory_space<vmem>>, %arg5: memref<2x8x256xf32, #tpu.memory_space<vmem>>) attributes {dimension_semantics = [#tpu.dimension_semantics<arbitrary>], iteration_bounds = array<i64: 1>, scalar_prefetch = 0 : i64, scratch_operands = 0 : i64, tpu.core_type = #tpu.core_type<tc>, window_params = [{pipeline_mode = #tpu.pipeline_mode<synchronous>, transform_indices = @transform_0, window_bounds = array<i64: 2, 18, 18, 4>}, {pipeline_mode = #tpu.pipeline_mode<synchronous>, transform_indices = @transform_1, window_bounds = array<i64: 9, 8, 4>}, {pipeline_mode = #tpu.pipeline_mode<synchronous>, transform_indices = @transform_2, window_bounds = array<i64: 8, 1>}, {pipeline_mode = #tpu.pipeline_mode<synchronous>, transform_indices = @transform_3, window_bounds = array<i64: 8, 1>}, {pipeline_mode = #tpu.pipeline_mode<synchronous>, transform_indices = @transform_4, window_bounds = array<i64: 2, 8, 256>}]} {
    %cst = arith.constant 0.000000e+00 : f32
    %0 = vector.broadcast %cst : f32 to vector<8x512xf32>
    %c0 = arith.constant 0 : index
    %c0_0 = arith.constant 0 : index
    %c0_1 = arith.constant 0 : index
    %c0_2 = arith.constant 0 : index
    %1 = vector.load %arg1[%c0, %c0_0, %c0_1, %c0_2] : memref<2x18x18x4xf32, #tpu.memory_space<vmem>>, vector<2x16x16x4xf32>
    %2 = vector.shape_cast %1 : vector<2x16x16x4xf32> to vector<512x4xf32>
    %c0_3 = arith.constant 0 : index
    %c0_4 = arith.constant 0 : index
    %c0_5 = arith.constant 0 : index
    %3 = vector.load %arg2[%c0_3, %c0_4, %c0_5] : memref<9x8x4xf32, #tpu.memory_space<vmem>>, vector<1x8x4xf32>
    %4 = vector.shape_cast %3 : vector<1x8x4xf32> to vector<8x4xf32>
    %cst_6 = arith.constant dense<0.000000e+00> : vector<8x512xf32>
    %5 = tpu.matmul %4, %2, %cst_6 {dimension_numbers = #tpu.dot_dimension_numbers<[1], [1], [0], [0], [0, 0, 1, 0], [], []>} : vector<8x4xf32>, vector<512x4xf32>, vector<8x512xf32> -> vector<8x512xf32>
    %6 = arith.addf %0, %5 : vector<8x512xf32>
    %c0_7 = arith.constant 0 : index
    %c0_8 = arith.constant 0 : index
    %c1 = arith.constant 1 : index
    %c0_9 = arith.constant 0 : index
    %7 = vector.load %arg1[%c0_7, %c0_8, %c1, %c0_9] : memref<2x18x18x4xf32, #tpu.memory_space<vmem>>, vector<2x16x16x4xf32>
    %8 = vector.shape_cast %7 : vector<2x16x16x4xf32> to vector<512x4xf32>
    %c1_10 = arith.constant 1 : index
    %c0_11 = arith.constant 0 : index
    %c0_12 = arith.constant 0 : index
    %9 = vector.load %arg2[%c1_10, %c0_11, %c0_12] : memref<9x8x4xf32, #tpu.memory_space<vmem>>, vector<1x8x4xf32>
    %10 = vector.shape_cast %9 : vector<1x8x4xf32> to vector<8x4xf32>
    %cst_13 = arith.constant dense<0.000000e+00> : vector<8x512xf32>
    %11 = tpu.matmul %10, %8, %cst_13 {dimension_numbers = #tpu.dot_dimension_numbers<[1], [1], [0], [0], [0, 0, 1, 0], [], []>} : vector<8x4xf32>, vector<512x4xf32>, vector<8x512xf32> -> vector<8x512xf32>
    %12 = arith.addf %6, %11 : vector<8x512xf32>
    %c0_14 = arith.constant 0 : index
    %c0_15 = arith.constant 0 : index
    %c2 = arith.constant 2 : index
    %c0_16 = arith.constant 0 : index
    %13 = vector.load %arg1[%c0_14, %c0_15, %c2, %c0_16] : memref<2x18x18x4xf32, #tpu.memory_space<vmem>>, vector<2x16x16x4xf32>
    %14 = vector.shape_cast %13 : vector<2x16x16x4xf32> to vector<512x4xf32>
    %c2_17 = arith.constant 2 : index
    %c0_18 = arith.constant 0 : index
    %c0_19 = arith.constant 0 : index
    %15 = vector.load %arg2[%c2_17, %c0_18, %c0_19] : memref<9x8x4xf32, #tpu.memory_space<vmem>>, vector<1x8x4xf32>
    %16 = vector.shape_cast %15 : vector<1x8x4xf32> to vector<8x4xf32>
    %cst_20 = arith.constant dense<0.000000e+00> : vector<8x512xf32>
    %17 = tpu.matmul %16, %14, %cst_20 {dimension_numbers = #tpu.dot_dimension_numbers<[1], [1], [0], [0], [0, 0, 1, 0], [], []>} : vector<8x4xf32>, vector<512x4xf32>, vector<8x512xf32> -> vector<8x512xf32>
    %18 = arith.addf %12, %17 : vector<8x512xf32>
    %c0_21 = arith.constant 0 : index
    %c1_22 = arith.constant 1 : index
    %c0_23 = arith.constant 0 : index
    %c0_24 = arith.constant 0 : index
    %19 = vector.load %arg1[%c0_21, %c1_22, %c0_23, %c0_24] : memref<2x18x18x4xf32, #tpu.memory_space<vmem>>, vector<2x16x16x4xf32>
    %20 = vector.shape_cast %19 : vector<2x16x16x4xf32> to vector<512x4xf32>
    %c3 = arith.constant 3 : index
    %c0_25 = arith.constant 0 : index
    %c0_26 = arith.constant 0 : index
    %21 = vector.load %arg2[%c3, %c0_25, %c0_26] : memref<9x8x4xf32, #tpu.memory_space<vmem>>, vector<1x8x4xf32>
    %22 = vector.shape_cast %21 : vector<1x8x4xf32> to vector<8x4xf32>
    %cst_27 = arith.constant dense<0.000000e+00> : vector<8x512xf32>
    %23 = tpu.matmul %22, %20, %cst_27 {dimension_numbers = #tpu.dot_dimension_numbers<[1], [1], [0], [0], [0, 0, 1, 0], [], []>} : vector<8x4xf32>, vector<512x4xf32>, vector<8x512xf32> -> vector<8x512xf32>
    %24 = arith.addf %18, %23 : vector<8x512xf32>
    %c0_28 = arith.constant 0 : index
    %c1_29 = arith.constant 1 : index
    %c1_30 = arith.constant 1 : index
    %c0_31 = arith.constant 0 : index
    %25 = vector.load %arg1[%c0_28, %c1_29, %c1_30, %c0_31] : memref<2x18x18x4xf32, #tpu.memory_space<vmem>>, vector<2x16x16x4xf32>
    %26 = vector.shape_cast %25 : vector<2x16x16x4xf32> to vector<512x4xf32>
    %c4 = arith.constant 4 : index
    %c0_32 = arith.constant 0 : index
    %c0_33 = arith.constant 0 : index
    %27 = vector.load %arg2[%c4, %c0_32, %c0_33] : memref<9x8x4xf32, #tpu.memory_space<vmem>>, vector<1x8x4xf32>
    %28 = vector.shape_cast %27 : vector<1x8x4xf32> to vector<8x4xf32>
    %cst_34 = arith.constant dense<0.000000e+00> : vector<8x512xf32>
    %29 = tpu.matmul %28, %26, %cst_34 {dimension_numbers = #tpu.dot_dimension_numbers<[1], [1], [0], [0], [0, 0, 1, 0], [], []>} : vector<8x4xf32>, vector<512x4xf32>, vector<8x512xf32> -> vector<8x512xf32>
    %30 = arith.addf %24, %29 : vector<8x512xf32>
    %c0_35 = arith.constant 0 : index
    %c1_36 = arith.constant 1 : index
    %c2_37 = arith.constant 2 : index
    %c0_38 = arith.constant 0 : index
    %31 = vector.load %arg1[%c0_35, %c1_36, %c2_37, %c0_38] : memref<2x18x18x4xf32, #tpu.memory_space<vmem>>, vector<2x16x16x4xf32>
    %32 = vector.shape_cast %31 : vector<2x16x16x4xf32> to vector<512x4xf32>
    %c5 = arith.constant 5 : index
    %c0_39 = arith.constant 0 : index
    %c0_40 = arith.constant 0 : index
    %33 = vector.load %arg2[%c5, %c0_39, %c0_40] : memref<9x8x4xf32, #tpu.memory_space<vmem>>, vector<1x8x4xf32>
    %34 = vector.shape_cast %33 : vector<1x8x4xf32> to vector<8x4xf32>
    %cst_41 = arith.constant dense<0.000000e+00> : vector<8x512xf32>
    %35 = tpu.matmul %34, %32, %cst_41 {dimension_numbers = #tpu.dot_dimension_numbers<[1], [1], [0], [0], [0, 0, 1, 0], [], []>} : vector<8x4xf32>, vector<512x4xf32>, vector<8x512xf32> -> vector<8x512xf32>
    %36 = arith.addf %30, %35 : vector<8x512xf32>
    %c0_42 = arith.constant 0 : index
    %c2_43 = arith.constant 2 : index
    %c0_44 = arith.constant 0 : index
    %c0_45 = arith.constant 0 : index
    %37 = vector.load %arg1[%c0_42, %c2_43, %c0_44, %c0_45] : memref<2x18x18x4xf32, #tpu.memory_space<vmem>>, vector<2x16x16x4xf32>
    %38 = vector.shape_cast %37 : vector<2x16x16x4xf32> to vector<512x4xf32>
    %c6 = arith.constant 6 : index
    %c0_46 = arith.constant 0 : index
    %c0_47 = arith.constant 0 : index
    %39 = vector.load %arg2[%c6, %c0_46, %c0_47] : memref<9x8x4xf32, #tpu.memory_space<vmem>>, vector<1x8x4xf32>
    %40 = vector.shape_cast %39 : vector<1x8x4xf32> to vector<8x4xf32>
    %cst_48 = arith.constant dense<0.000000e+00> : vector<8x512xf32>
    %41 = tpu.matmul %40, %38, %cst_48 {dimension_numbers = #tpu.dot_dimension_numbers<[1], [1], [0], [0], [0, 0, 1, 0], [], []>} : vector<8x4xf32>, vector<512x4xf32>, vector<8x512xf32> -> vector<8x512xf32>
    %42 = arith.addf %36, %41 : vector<8x512xf32>
    %c0_49 = arith.constant 0 : index
    %c2_50 = arith.constant 2 : index
    %c1_51 = arith.constant 1 : index
    %c0_52 = arith.constant 0 : index
    %43 = vector.load %arg1[%c0_49, %c2_50, %c1_51, %c0_52] : memref<2x18x18x4xf32, #tpu.memory_space<vmem>>, vector<2x16x16x4xf32>
    %44 = vector.shape_cast %43 : vector<2x16x16x4xf32> to vector<512x4xf32>
    %c7 = arith.constant 7 : index
    %c0_53 = arith.constant 0 : index
    %c0_54 = arith.constant 0 : index
    %45 = vector.load %arg2[%c7, %c0_53, %c0_54] : memref<9x8x4xf32, #tpu.memory_space<vmem>>, vector<1x8x4xf32>
    %46 = vector.shape_cast %45 : vector<1x8x4xf32> to vector<8x4xf32>
    %cst_55 = arith.constant dense<0.000000e+00> : vector<8x512xf32>
    %47 = tpu.matmul %46, %44, %cst_55 {dimension_numbers = #tpu.dot_dimension_numbers<[1], [1], [0], [0], [0, 0, 1, 0], [], []>} : vector<8x4xf32>, vector<512x4xf32>, vector<8x512xf32> -> vector<8x512xf32>
    %48 = arith.addf %42, %47 : vector<8x512xf32>
    %c0_56 = arith.constant 0 : index
    %c2_57 = arith.constant 2 : index
    %c2_58 = arith.constant 2 : index
    %c0_59 = arith.constant 0 : index
    %49 = vector.load %arg1[%c0_56, %c2_57, %c2_58, %c0_59] : memref<2x18x18x4xf32, #tpu.memory_space<vmem>>, vector<2x16x16x4xf32>
    %50 = vector.shape_cast %49 : vector<2x16x16x4xf32> to vector<512x4xf32>
    %c8 = arith.constant 8 : index
    %c0_60 = arith.constant 0 : index
    %c0_61 = arith.constant 0 : index
    %51 = vector.load %arg2[%c8, %c0_60, %c0_61] : memref<9x8x4xf32, #tpu.memory_space<vmem>>, vector<1x8x4xf32>
    %52 = vector.shape_cast %51 : vector<1x8x4xf32> to vector<8x4xf32>
    %cst_62 = arith.constant dense<0.000000e+00> : vector<8x512xf32>
    %53 = tpu.matmul %52, %50, %cst_62 {dimension_numbers = #tpu.dot_dimension_numbers<[1], [1], [0], [0], [0, 0, 1, 0], [], []>} : vector<8x4xf32>, vector<512x4xf32>, vector<8x512xf32> -> vector<8x512xf32>
    %54 = arith.addf %48, %53 : vector<8x512xf32>
    %cst_63 = arith.constant dense<0.000000e+00> : vector<8xf32>
    %55 = vector.multi_reduction <add>, %54, %cst_63 [1] : vector<8x512xf32> to vector<8xf32>
    %56 = vector.shape_cast %55 : vector<8xf32> to vector<8x1xf32>
    %cst_64 = arith.constant 0.001953125 : f32
    %57 = vector.broadcast %cst_64 : f32 to vector<8x1xf32>
    %58 = arith.mulf %56, %57 : vector<8x1xf32>
    %59 = vector.broadcast %58 : vector<8x1xf32> to vector<8x512xf32>
    %60 = arith.subf %54, %59 : vector<8x512xf32>
    %61 = arith.mulf %60, %60 : vector<8x512xf32>
    %cst_65 = arith.constant dense<0.000000e+00> : vector<8xf32>
    %62 = vector.multi_reduction <add>, %61, %cst_65 [1] : vector<8x512xf32> to vector<8xf32>
    %63 = vector.shape_cast %62 : vector<8xf32> to vector<8x1xf32>
    %cst_66 = arith.constant 0.001953125 : f32
    %64 = vector.broadcast %cst_66 : f32 to vector<8x1xf32>
    %65 = arith.mulf %63, %64 : vector<8x1xf32>
    %cst_67 = arith.constant 9.99999974E-5 : f32
    %66 = vector.broadcast %cst_67 : f32 to vector<8x1xf32>
    %67 = arith.addf %65, %66 : vector<8x1xf32>
    %68 = math.rsqrt %67 : vector<8x1xf32>
    %c0_68 = arith.constant 0 : index
    %c0_69 = arith.constant 0 : index
    %69 = vector.load %arg3[%c0_68, %c0_69] : memref<8x1xf32, #tpu.memory_space<vmem>>, vector<8x1xf32>
    %70 = arith.mulf %69, %68 : vector<8x1xf32>
    %71 = vector.broadcast %70 : vector<8x1xf32> to vector<8x512xf32>
    %72 = arith.mulf %60, %71 : vector<8x512xf32>
    %c0_70 = arith.constant 0 : index
    %c0_71 = arith.constant 0 : index
    %73 = vector.load %arg4[%c0_70, %c0_71] : memref<8x1xf32, #tpu.memory_space<vmem>>, vector<8x1xf32>
    %74 = vector.broadcast %73 : vector<8x1xf32> to vector<8x512xf32>
    %75 = arith.addf %72, %74 : vector<8x512xf32>
    %cst_72 = arith.constant 0.000000e+00 : f32
    %76 = vector.broadcast %cst_72 : f32 to vector<8x512xf32>
    %77 = arith.maximumf %75, %76 : vector<8x512xf32>
    %78 = vector.extract_strided_slice %77 {offsets = [0, 0], sizes = [8, 256], strides = [1, 1]} : vector<8x512xf32> to vector<8x256xf32>
    %c0_73 = arith.constant 0 : index
    %c0_74 = arith.constant 0 : index
    %c0_75 = arith.constant 0 : index
    %79 = vector.load %arg5[%c0_73, %c0_74, %c0_75] : memref<2x8x256xf32, #tpu.memory_space<vmem>>, vector<1x8x256xf32>
    %80 = vector.shape_cast %79 : vector<1x8x256xf32> to vector<8x256xf32>
    %81 = vector.shape_cast %78 : vector<8x256xf32> to vector<1x8x256xf32>
    tpu.vector_store %arg5[%c0_73, %c0_74, %c0_75], %81 {strides = array<i32>} : memref<2x8x256xf32, #tpu.memory_space<vmem>>, vector<1x8x256xf32>,
    %82 = vector.extract_strided_slice %77 {offsets = [0, 256], sizes = [8, 256], strides = [1, 1]} : vector<8x512xf32> to vector<8x256xf32>
    %c1_76 = arith.constant 1 : index
    %c0_77 = arith.constant 0 : index
    %c0_78 = arith.constant 0 : index
    %83 = vector.load %arg5[%c1_76, %c0_77, %c0_78] : memref<2x8x256xf32, #tpu.memory_space<vmem>>, vector<1x8x256xf32>
    %84 = vector.shape_cast %83 : vector<1x8x256xf32> to vector<8x256xf32>
    %85 = vector.shape_cast %82 : vector<8x256xf32> to vector<1x8x256xf32>
    tpu.vector_store %arg5[%c1_76, %c0_77, %c0_78], %85 {strides = array<i32>} : memref<2x8x256xf32, #tpu.memory_space<vmem>>, vector<1x8x256xf32>,
    return
  }
  func.func @transform_0(%arg0: i32) -> (i32, i32, i32, i32) {
    %c0_i32 = arith.constant 0 : i32
    %c0_i32_0 = arith.constant 0 : i32
    %c0_i32_1 = arith.constant 0 : i32
    %c0_i32_2 = arith.constant 0 : i32
    %c0_i32_3 = arith.constant 0 : i32
    return %c0_i32, %c0_i32_0, %c0_i32_1, %c0_i32_2 : i32, i32, i32, i32
  }
  func.func @transform_1(%arg0: i32) -> (i32, i32, i32) {
    %c0_i32 = arith.constant 0 : i32
    %c0_i32_0 = arith.constant 0 : i32
    %c0_i32_1 = arith.constant 0 : i32
    %c0_i32_2 = arith.constant 0 : i32
    return %c0_i32, %c0_i32_0, %c0_i32_1 : i32, i32, i32
  }
  func.func @transform_2(%arg0: i32) -> (i32, i32) {
    %c0_i32 = arith.constant 0 : i32
    %c0_i32_0 = arith.constant 0 : i32
    %c0_i32_1 = arith.constant 0 : i32
    return %c0_i32, %c0_i32_0 : i32, i32
  }
  func.func @transform_3(%arg0: i32) -> (i32, i32) {
    %c0_i32 = arith.constant 0 : i32
    %c0_i32_0 = arith.constant 0 : i32
    %c0_i32_1 = arith.constant 0 : i32
    return %c0_i32, %c0_i32_0 : i32, i32
  }
  func.func @transform_4(%arg0: i32) -> (i32, i32, i32) {
    %c0_i32 = arith.constant 0 : i32
    %c0_i32_0 = arith.constant 0 : i32
    %c0_i32_1 = arith.constant 0 : i32
    %c0_i32_2 = arith.constant 0 : i32
    return %c0_i32, %c0_i32_0, %c0_i32_1 : i32, i32, i32
  }
}

</mosaic_0001>

<llo_original>
// kernel: _lambda_.1
$region0: #{_lambda_.1}
  #allocation0 [shape = 'u32[]', space=smem, size = 0x4, offset = 0x4, fixed_abs, tag = 'smem constant byte address 0x4 - core index']
  #allocation1 [shape = 'u32[72,128]{1,0:T(1,128)}', space=vmem, size = 0x9000, scoped, tag = 'internal scratch']
  %s0 = inlined_call_operand.vmem [shape: f32[2,18,18,4], index: 0, kind: input, shape index: {}]
  %s1 = inlined_call_operand.vmem [shape: f32[9,8,4], index: 1, kind: input, shape index: {}]
  %s2 = inlined_call_operand.vmem [shape: f32[8,1], index: 2, kind: input, shape index: {}]
  %s3 = inlined_call_operand.vmem [shape: f32[8,1], index: 3, kind: input, shape index: {}]
  %s4 = inlined_call_operand.vmem [shape: f32[2,8,256], index: 4, kind: output, shape index: {}]
  %s5 = sld [smem:[#allocation0]]
  $region26: #{_lambda_.1} parent=0
    _
  %s7 = ssub.s32 1, %s5
  %s8 = scalar_select 0, %s7, %s5
  // Predicated region
  $region2: #{_lambda_.1} parent=0 // pred_check
    _
  $region3: #{_lambda_.1} parent=0 // pred_check_branch
    %10 = sbr.rel (0) target = $region5
  $region4: #{_lambda_.1} parent=0 // pred_region
    _
  $region5: #{_lambda_.1} parent=0 // pred_fallthru
    _
  // Predicated region
  $region6: #{_lambda_.1} parent=0 // pred_check
    _
  $region7: #{_lambda_.1} parent=0 // pred_check_branch
    %12 = sbr.rel (0) target = $region9
  $region8: #{_lambda_.1} parent=0 // pred_region
    _
  $region9: #{_lambda_.1} parent=0 // pred_fallthru
    _
  // Predicated region
  $region10: #{_lambda_.1} parent=0 // pred_check
    _
  $region11: #{_lambda_.1} parent=0 // pred_check_branch
    %14 = sbr.rel (0) target = $region13
  $region12: #{_lambda_.1} parent=0 // pred_region
    _
  $region13: #{_lambda_.1} parent=0 // pred_fallthru
    _
  // Predicated region
  $region14: #{_lambda_.1} parent=0 // pred_check
    _
  $region15: #{_lambda_.1} parent=0 // pred_check_branch
    %16 = sbr.rel (0) target = $region17
  $region16: #{_lambda_.1} parent=0 // pred_region
    _
  $region17: #{_lambda_.1} parent=0 // pred_fallthru
    _
  %v17 = vld [vmem:[%s0] sm:$0xff]
  %v18 = vld [vmem:[%s0 + $0x8] sm:$0xff]
  %v19 = vld [vmem:[%s0 + $0x18] sm:$0xff]
  %v20 = vld [vmem:[%s0 + $0x20] sm:$0xff]
  %v21 = vld [vmem:[%s0 + $0x30] sm:$0xff]
  %v22 = vld [vmem:[%s0 + $0x38] sm:$0xff]
  %v23 = vld [vmem:[%s0 + $0x48] sm:$0xff]
  %v24 = vld [vmem:[%s0 + $0x50] sm:$0xff]
  %v25 = vld [vmem:[%s0 + $0x60] sm:$0xff]
  %v26 = vld [vmem:[%s0 + $0x68] sm:$0xff]
  %v27 = vld [vmem:[%s0 + $0x78] sm:$0xff]
  %v28 = vld [vmem:[%s0 + $0x80] sm:$0xff]
  %v29 = vld [vmem:[%s0 + $0x90] sm:$0xff]
  %v30 = vld [vmem:[%s0 + $0x98] sm:$0xff]
  %v31 = vld [vmem:[%s0 + $0xa8] sm:$0xff]
  %v32 = vld [vmem:[%s0 + $0xb0] sm:$0xff]
  %v33 = vld [vmem:[%s0 + $0xc0] sm:$0xff]
  %v34 = vld [vmem:[%s0 + $0xc8] sm:$0xff]
  %v35 = vld [vmem:[%s0 + $0xd8] sm:$0xff]
  %v36 = vld [vmem:[%s0 + $0xe0] sm:$0xff]
  %v37 = vld [vmem:[%s0 + $0xf0] sm:$0xff]
  %v38 = vld [vmem:[%s0 + $0xf8] sm:$0xff]
  %v39 = vld [vmem:[%s0 + $0x108] sm:$0xff]
  %v40 = vld [vmem:[%s0 + $0x110] sm:$0xff]
  %v41 = vld [vmem:[%s0 + $0x120] sm:$0xff]
  %v42 = vld [vmem:[%s0 + $0x128] sm:$0xff]
  %v43 = vld [vmem:[%s0 + $0x138] sm:$0xff]
  %v44 = vld [vmem:[%s0 + $0x140] sm:$0xff]
  %v45 = vld [vmem:[%s0 + $0x150] sm:$0xff]
  %v46 = vld [vmem:[%s0 + $0x158] sm:$0xff]
  %v47 = vld [vmem:[%s0 + $0x168] sm:$0xff]
  %v48 = vld [vmem:[%s0 + $0x170] sm:$0xff]
  %v49 = vld [vmem:[%s0 + $0x1b0] sm:$0xff]
  %v50 = vld [vmem:[%s0 + $0x1b8] sm:$0xff]
  %v51 = vld [vmem:[%s0 + $0x1c8] sm:$0xff]
  %v52 = vld [vmem:[%s0 + $0x1d0] sm:$0xff]
  %v53 = vld [vmem:[%s0 + $0x1e0] sm:$0xff]
  %v54 = vld [vmem:[%s0 + $0x1e8] sm:$0xff]
  %v55 = vld [vmem:[%s0 + $0x1f8] sm:$0xff]
  %v56 = vld [vmem:[%s0 + $0x200] sm:$0xff]
  %v57 = vld [vmem:[%s0 + $0x210] sm:$0xff]
  %v58 = vld [vmem:[%s0 + $0x218] sm:$0xff]
  %v59 = vld [vmem:[%s0 + $0x228] sm:$0xff]
  %v60 = vld [vmem:[%s0 + $0x230] sm:$0xff]
  %v61 = vld [vmem:[%s0 + $0x240] sm:$0xff]
  %v62 = vld [vmem:[%s0 + $0x248] sm:$0xff]
  %v63 = vld [vmem:[%s0 + $0x258] sm:$0xff]
  %v64 = vld [vmem:[%s0 + $0x260] sm:$0xff]
  %v65 = vld [vmem:[%s0 + $0x270] sm:$0xff]
  %v66 = vld [vmem:[%s0 + $0x278] sm:$0xff]
  %v67 = vld [vmem:[%s0 + $0x288] sm:$0xff]
  %v68 = vld [vmem:[%s0 + $0x290] sm:$0xff]
  %v69 = vld [vmem:[%s0 + $0x2a0] sm:$0xff]
  %v70 = vld [vmem:[%s0 + $0x2a8] sm:$0xff]
  %v71 = vld [vmem:[%s0 + $0x2b8] sm:$0xff]
  %v72 = vld [vmem:[%s0 + $0x2c0] sm:$0xff]
  %v73 = vld [vmem:[%s0 + $0x2d0] sm:$0xff]
  %v74 = vld [vmem:[%s0 + $0x2d8] sm:$0xff]
  %v75 = vld [vmem:[%s0 + $0x2e8] sm:$0xff]
  %v76 = vld [vmem:[%s0 + $0x2f0] sm:$0xff]
  %v77 = vld [vmem:[%s0 + $0x300] sm:$0xff]
  %v78 = vld [vmem:[%s0 + $0x308] sm:$0xff]
  %v79 = vld [vmem:[%s0 + $0x318] sm:$0xff]
  %v80 = vld [vmem:[%s0 + $0x320] sm:$0xff]
  %v81 = vld [vmem:[%s1] sm:$0xff]
  %v82 = vld [vmem:[%s0 + $0x1] sm:$0xff]
  %v83 = vld [vmem:[%s0 + $0x9] sm:$0xff]
  %v84 = vld [vmem:[%s0 + $0x19] sm:$0xff]
  %v85 = vld [vmem:[%s0 + $0x21] sm:$0xff]
  %v86 = vld [vmem:[%s0 + $0x31] sm:$0xff]
  %v87 = vld [vmem:[%s0 + $0x39] sm:$0xff]
  %v88 = vld [vmem:[%s0 + $0x49] sm:$0xff]
  %v89 = vld [vmem:[%s0 + $0x51] sm:$0xff]
  %v90 = vld [vmem:[%s0 + $0x61] sm:$0xff]
  %v91 = vld [vmem:[%s0 + $0x69] sm:$0xff]
  %v92 = vld [vmem:[%s0 + $0x79] sm:$0xff]
  %v93 = vld [vmem:[%s0 + $0x81] sm:$0xff]
  %v94 = vld [vmem:[%s0 + $0x91] sm:$0xff]
  %v95 = vld [vmem:[%s0 + $0x99] sm:$0xff]
  %v96 = vld [vmem:[%s0 + $0xa9] sm:$0xff]
  %v97 = vld [vmem:[%s0 + $0xb1] sm:$0xff]
  %v98 = vld [vmem:[%s0 + $0xc1] sm:$0xff]
  %v99 = vld [vmem:[%s0 + $0xc9] sm:$0xff]
  %v100 = vld [vmem:[%s0 + $0xd9] sm:$0xff]
  %v101 = vld [vmem:[%s0 + $0xe1] sm:$0xff]
  %v102 = vld [vmem:[%s0 + $0xf1] sm:$0xff]
  %v103 = vld [vmem:[%s0 + $0xf9] sm:$0xff]
  %v104 = vld [vmem:[%s0 + $0x109] sm:$0xff]
  %v105 = vld [vmem:[%s0 + $0x111] sm:$0xff]
  %v106 = vld [vmem:[%s0 + $0x121] sm:$0xff]
  %v107 = vld [vmem:[%s0 + $0x129] sm:$0xff]
  %v108 = vld [vmem:[%s0 + $0x139] sm:$0xff]
  %v109 = vld [vmem:[%s0 + $0x141] sm:$0xff]
  %v110 = vld [vmem:[%s0 + $0x151] sm:$0xff]
  %v111 = vld [vmem:[%s0 + $0x159] sm:$0xff]
  %v112 = vld [vmem:[%s0 + $0x169] sm:$0xff]
  %v113 = vld [vmem:[%s0 + $0x171] sm:$0xff]
  %v114 = vld [vmem:[%s0 + $0x1b1] sm:$0xff]
  %v115 = vld [vmem:[%s0 + $0x1b9] sm:$0xff]
  %v116 = vld [vmem:[%s0 + $0x1c9] sm:$0xff]
  %v117 = vld [vmem:[%s0 + $0x1d1] sm:$0xff]
  %v118 = vld [vmem:[%s0 + $0x1e1] sm:$0xff]
  %v119 = vld [vmem:[%s0 + $0x1e9] sm:$0xff]
  %v120 = vld [vmem:[%s0 + $0x1f9] sm:$0xff]
  %v121 = vld [vmem:[%s0 + $0x201] sm:$0xff]
  %v122 = vld [vmem:[%s0 + $0x211] sm:$0xff]
  %v123 = vld [vmem:[%s0 + $0x219] sm:$0xff]
  %v124 = vld [vmem:[%s0 + $0x229] sm:$0xff]
  %v125 = vld [vmem:[%s0 + $0x231] sm:$0xff]
  %v126 = vld [vmem:[%s0 + $0x241] sm:$0xff]
  %v127 = vld [vmem:[%s0 + $0x249] sm:$0xff]
  %v128 = vld [vmem:[%s0 + $0x259] sm:$0xff]
  %v129 = vld [vmem:[%s0 + $0x261] sm:$0xff]
  %v130 = vld [vmem:[%s0 + $0x271] sm:$0xff]
  %v131 = vld [vmem:[%s0 + $0x279] sm:$0xff]
  %v132 = vld [vmem:[%s0 + $0x289] sm:$0xff]
  %v133 = vld [vmem:[%s0 + $0x291] sm:$0xff]
  %v134 = vld [vmem:[%s0 + $0x2a1] sm:$0xff]
  %v135 = vld [vmem:[%s0 + $0x2a9] sm:$0xff]
  %v136 = vld [vmem:[%s0 + $0x2b9] sm:$0xff]
  %v137 = vld [vmem:[%s0 + $0x2c1] sm:$0xff]
  %v138 = vld [vmem:[%s0 + $0x2d1] sm:$0xff]
  %v139 = vld [vmem:[%s0 + $0x2d9] sm:$0xff]
  %v140 = vld [vmem:[%s0 + $0x2e9] sm:$0xff]
  %v141 = vld [vmem:[%s0 + $0x2f1] sm:$0xff]
  %v142 = vld [vmem:[%s0 + $0x301] sm:$0xff]
  %v143 = vld [vmem:[%s0 + $0x309] sm:$0xff]
  %v144 = vld [vmem:[%s0 + $0x319] sm:$0xff]
  %v145 = vld [vmem:[%s0 + $0x321] sm:$0xff]
  %s146 = scalar_lea.vmem %s1, 8
  %v147 = vld [vmem:[%s146] sm:$0xff]
  %vm148 = vcmask 31744
  %v150 = vsel %vm148, %v147, 0
  %v153 = vsel %vm148, %v82, 0
  %v156 = vsel %vm148, %v83, 0
  %v159 = vsel %vm148, %v84, 0
  %v162 = vsel %vm148, %v85, 0
  %v165 = vsel %vm148, %v86, 0
  %v168 = vsel %vm148, %v87, 0
  %v171 = vsel %vm148, %v88, 0
  %v174 = vsel %vm148, %v89, 0
  %v177 = vsel %vm148, %v90, 0
  %v180 = vsel %vm148, %v91, 0
  %v183 = vsel %vm148, %v92, 0
  %v186 = vsel %vm148, %v93, 0
  %v189 = vsel %vm148, %v94, 0
  %v192 = vsel %vm148, %v95, 0
  %v195 = vsel %vm148, %v96, 0
  %v198 = vsel %vm148, %v97, 0
  %v201 = vsel %vm148, %v98, 0
  %v204 = vsel %vm148, %v99, 0
  %v207 = vsel %vm148, %v100, 0
  %v210 = vsel %vm148, %v101, 0
  %v213 = vsel %vm148, %v102, 0
  %v216 = vsel %vm148, %v103, 0
  %v219 = vsel %vm148, %v104, 0
  %v222 = vsel %vm148, %v105, 0
  %v225 = vsel %vm148, %v106, 0
  %v228 = vsel %vm148, %v107, 0
  %v231 = vsel %vm148, %v108, 0
  %v234 = vsel %vm148, %v109, 0
  %v237 = vsel %vm148, %v110, 0
  %v240 = vsel %vm148, %v111, 0
  %v243 = vsel %vm148, %v112, 0
  %v246 = vsel %vm148, %v113, 0
  %v249 = vsel %vm148, %v114, 0
  %v252 = vsel %vm148, %v115, 0
  %v255 = vsel %vm148, %v116, 0
  %v258 = vsel %vm148, %v117, 0
  %v261 = vsel %vm148, %v118, 0
  %v264 = vsel %vm148, %v119, 0
  %v267 = vsel %vm148, %v120, 0
  %v270 = vsel %vm148, %v121, 0
  %v273 = vsel %vm148, %v122, 0
  %v276 = vsel %vm148, %v123, 0
  %v279 = vsel %vm148, %v124, 0
  %v282 = vsel %vm148, %v125, 0
  %v285 = vsel %vm148, %v126, 0
  %v288 = vsel %vm148, %v127, 0
  %v291 = vsel %vm148, %v128, 0
  %v294 = vsel %vm148, %v129, 0
  %v297 = vsel %vm148, %v130, 0
  %v300 = vsel %vm148, %v131, 0
  %v303 = vsel %vm148, %v132, 0
  %v306 = vsel %vm148, %v133, 0
  %v309 = vsel %vm148, %v134, 0
  %v312 = vsel %vm148, %v135, 0
  %v315 = vsel %vm148, %v136, 0
  %v318 = vsel %vm148, %v137, 0
  %v321 = vsel %vm148, %v138, 0
  %v324 = vsel %vm148, %v139, 0
  %v327 = vsel %vm148, %v140, 0
  %v330 = vsel %vm148, %v141, 0
  %v333 = vsel %vm148, %v142, 0
  %v336 = vsel %vm148, %v143, 0
  %v339 = vsel %vm148, %v144, 0
  %v342 = vsel %vm148, %v145, 0
  %344 = vmatpush.xpose.msra.mxu0 %v198
  %345 = vmatpush.xpose.msra.mxu0 %v195
  %346 = vmatpush.xpose.msra.mxu0 %v192
  %347 = vmatpush.xpose.msra.mxu0 %v189
  %348 = vmatpush.xpose.msra.mxu0 %v186
  %349 = vmatpush.xpose.msra.mxu0 %v183
  %350 = vmatpush.xpose.msra.mxu0 %v180
  %351 = vmatpush.xpose.msra.mxu0 %v177
  %352 = vmatpush.xpose.msra.mxu0 %v174
  %353 = vmatpush.xpose.msra.mxu0 %v171
  %354 = vmatpush.xpose.msra.mxu0 %v168
  %355 = vmatpush.xpose.msra.mxu0 %v165
  %356 = vmatpush.xpose.msra.mxu0 %v162
  %357 = vmatpush.xpose.msra.mxu0 %v159
  %358 = vmatpush.xpose.msra.mxu0 %v156
  %359 = vmatpush.xpose.msra.mxu0 %v153
  %360 = vmatmul.f32.gmra.mxu0 %v150
  %v361 = vpop.f32.mrf.mxu0
  %v362 = vadd.f32 0.0, %v361
  %363 = vdwg.mxu0
  %364 = vmatpush.xpose.msra.mxu0 %v246
  %365 = vmatpush.xpose.msra.mxu0 %v243
  %366 = vmatpush.xpose.msra.mxu0 %v240
  %367 = vmatpush.xpose.msra.mxu0 %v237
  %368 = vmatpush.xpose.msra.mxu0 %v234
  %369 = vmatpush.xpose.msra.mxu0 %v231
  %370 = vmatpush.xpose.msra.mxu0 %v228
  %371 = vmatpush.xpose.msra.mxu0 %v225
  %372 = vmatpush.xpose.msra.mxu0 %v222
  %373 = vmatpush.xpose.msra.mxu0 %v219
  %374 = vmatpush.xpose.msra.mxu0 %v216
  %375 = vmatpush.xpose.msra.mxu0 %v213
  %376 = vmatpush.xpose.msra.mxu0 %v210
  %377 = vmatpush.xpose.msra.mxu0 %v207
  %378 = vmatpush.xpose.msra.mxu0 %v204
  %379 = vmatpush.xpose.msra.mxu0 %v201
  %380 = vmatmul.f32.gmra.mxu0 %v150
  %v381 = vpop.f32.mrf.mxu0
  %v382 = vadd.f32 0.0, %v381
  %383 = vdwg.mxu0
  %384 = vmatpush.xpose.msra.mxu0 %v294
  %385 = vmatpush.xpose.msra.mxu0 %v291
  %386 = vmatpush.xpose.msra.mxu0 %v288
  %387 = vmatpush.xpose.msra.mxu0 %v285
  %388 = vmatpush.xpose.msra.mxu0 %v282
  %389 = vmatpush.xpose.msra.mxu0 %v279
  %390 = vmatpush.xpose.msra.mxu0 %v276
  %391 = vmatpush.xpose.msra.mxu0 %v273
  %392 = vmatpush.xpose.msra.mxu0 %v270
  %393 = vmatpush.xpose.msra.mxu0 %v267
  %394 = vmatpush.xpose.msra.mxu0 %v264
  %395 = vmatpush.xpose.msra.mxu0 %v261
  %396 = vmatpush.xpose.msra.mxu0 %v258
  %397 = vmatpush.xpose.msra.mxu0 %v255
  %398 = vmatpush.xpose.msra.mxu0 %v252
  %399 = vmatpush.xpose.msra.mxu0 %v249
  %400 = vmatmul.f32.gmra.mxu0 %v150
  %v401 = vpop.f32.mrf.mxu0
  %v402 = vadd.f32 0.0, %v401
  %403 = vdwg.mxu0
  %404 = vmatpush.xpose.msra.mxu0 %v342
  %405 = vmatpush.xpose.msra.mxu0 %v339
  %406 = vmatpush.xpose.msra.mxu0 %v336
  %407 = vmatpush.xpose.msra.mxu0 %v333
  %408 = vmatpush.xpose.msra.mxu0 %v330
  %409 = vmatpush.xpose.msra.mxu0 %v327
  %410 = vmatpush.xpose.msra.mxu0 %v324
  %411 = vmatpush.xpose.msra.mxu0 %v321
  %412 = vmatpush.xpose.msra.mxu0 %v318
  %413 = vmatpush.xpose.msra.mxu0 %v315
  %414 = vmatpush.xpose.msra.mxu0 %v312
  %415 = vmatpush.xpose.msra.mxu0 %v309
  %416 = vmatpush.xpose.msra.mxu0 %v306
  %417 = vmatpush.xpose.msra.mxu0 %v303
  %418 = vmatpush.xpose.msra.mxu0 %v300
  %419 = vmatpush.xpose.msra.mxu0 %v297
  %420 = vmatmul.f32.gmra.mxu0 %v150
  %v421 = vpop.f32.mrf.mxu0
  %v422 = vadd.f32 0.0, %v421
  %423 = vdwg.mxu0
  %v425 = vsel %vm148, %v81, 0
  %v428 = vsel %vm148, %v17, 0
  %v431 = vsel %vm148, %v18, 0
  %v434 = vsel %vm148, %v19, 0
  %v437 = vsel %vm148, %v20, 0
  %v440 = vsel %vm148, %v21, 0
  %v443 = vsel %vm148, %v22, 0
  %v446 = vsel %vm148, %v23, 0
  %v449 = vsel %vm148, %v24, 0
  %v452 = vsel %vm148, %v25, 0
  %v455 = vsel %vm148, %v26, 0
  %v458 = vsel %vm148, %v27, 0
  %v461 = vsel %vm148, %v28, 0
  %v464 = vsel %vm148, %v29, 0
  %v467 = vsel %vm148, %v30, 0
  %v470 = vsel %vm148, %v31, 0
  %v473 = vsel %vm148, %v32, 0
  %v476 = vsel %vm148, %v33, 0
  %v479 = vsel %vm148, %v34, 0
  %v482 = vsel %vm148, %v35, 0
  %v485 = vsel %vm148, %v36, 0
  %v488 = vsel %vm148, %v37, 0
  %v491 = vsel %vm148, %v38, 0
  %v494 = vsel %vm148, %v39, 0
  %v497 = vsel %vm148, %v40, 0
  %v500 = vsel %vm148, %v41, 0
  %v503 = vsel %vm148, %v42, 0
  %v506 = vsel %vm148, %v43, 0
  %v509 = vsel %vm148, %v44, 0
  %v512 = vsel %vm148, %v45, 0
  %v515 = vsel %vm148, %v46, 0
  %v518 = vsel %vm148, %v47, 0
  %v521 = vsel %vm148, %v48, 0
  %v524 = vsel %vm148, %v49, 0
  %v527 = vsel %vm148, %v50, 0
  %v530 = vsel %vm148, %v51, 0
  %v533 = vsel %vm148, %v52, 0
  %v536 = vsel %vm148, %v53, 0
  %v539 = vsel %vm148, %v54, 0
  %v542 = vsel %vm148, %v55, 0
  %v545 = vsel %vm148, %v56, 0
  %v548 = vsel %vm148, %v57, 0
  %v551 = vsel %vm148, %v58, 0
  %v554 = vsel %vm148, %v59, 0
  %v557 = vsel %vm148, %v60, 0
  %v560 = vsel %vm148, %v61, 0
  %v563 = vsel %vm148, %v62, 0
  %v566 = vsel %vm148, %v63, 0
  %v569 = vsel %vm148, %v64, 0
  %v572 = vsel %vm148, %v65, 0
  %v575 = vsel %vm148, %v66, 0
  %v578 = vsel %vm148, %v67, 0
  %v581 = vsel %vm148, %v68, 0
  %v584 = vsel %vm148, %v69, 0
  %v587 = vsel %vm148, %v70, 0
  %v590 = vsel %vm148, %v71, 0
  %v593 = vsel %vm148, %v72, 0
  %v596 = vsel %vm148, %v73, 0
  %v599 = vsel %vm148, %v74, 0
  %v602 = vsel %vm148, %v75, 0
  %v605 = vsel %vm148, %v76, 0
  %v608 = vsel %vm148, %v77, 0
  %v611 = vsel %vm148, %v78, 0
  %v614 = vsel %vm148, %v79, 0
  %v617 = vsel %vm148, %v80, 0
  %619 = vmatpush.xpose.msra.mxu0 %v473
  %620 = vmatpush.xpose.msra.mxu0 %v470
  %621 = vmatpush.xpose.msra.mxu0 %v467
  %622 = vmatpush.xpose.msra.mxu0 %v464
  %623 = vmatpush.xpose.msra.mxu0 %v461
  %624 = vmatpush.xpose.msra.mxu0 %v458
  %625 = vmatpush.xpose.msra.mxu0 %v455
  %626 = vmatpush.xpose.msra.mxu0 %v452
  %627 = vmatpush.xpose.msra.mxu0 %v449
  %628 = vmatpush.xpose.msra.mxu0 %v446
  %629 = vmatpush.xpose.msra.mxu0 %v443
  %630 = vmatpush.xpose.msra.mxu0 %v440
  %631 = vmatpush.xpose.msra.mxu0 %v437
  %632 = vmatpush.xpose.msra.mxu0 %v434
  %633 = vmatpush.xpose.msra.mxu0 %v431
  %634 = vmatpush.xpose.msra.mxu0 %v428
  %635 = vmatmul.f32.gmra.mxu0 %v425
  %v636 = vpop.f32.mrf.mxu0
  %v637 = vadd.f32 %v362, %v636
  %638 = vdwg.mxu0
  %639 = vmatpush.xpose.msra.mxu0 %v521
  %640 = vmatpush.xpose.msra.mxu0 %v518
  %641 = vmatpush.xpose.msra.mxu0 %v515
  %642 = vmatpush.xpose.msra.mxu0 %v512
  %643 = vmatpush.xpose.msra.mxu0 %v509
  %644 = vmatpush.xpose.msra.mxu0 %v506
  %645 = vmatpush.xpose.msra.mxu0 %v503
  %646 = vmatpush.xpose.msra.mxu0 %v500
  %647 = vmatpush.xpose.msra.mxu0 %v497
  %648 = vmatpush.xpose.msra.mxu0 %v494
  %649 = vmatpush.xpose.msra.mxu0 %v491
  %650 = vmatpush.xpose.msra.mxu0 %v488
  %651 = vmatpush.xpose.msra.mxu0 %v485
  %652 = vmatpush.xpose.msra.mxu0 %v482
  %653 = vmatpush.xpose.msra.mxu0 %v479
  %654 = vmatpush.xpose.msra.mxu0 %v476
  %655 = vmatmul.f32.gmra.mxu0 %v425
  %v656 = vpop.f32.mrf.mxu0
  %v657 = vadd.f32 %v382, %v656
  %658 = vdwg.mxu0
  %659 = vmatpush.xpose.msra.mxu0 %v569
  %660 = vmatpush.xpose.msra.mxu0 %v566
  %661 = vmatpush.xpose.msra.mxu0 %v563
  %662 = vmatpush.xpose.msra.mxu0 %v560
  %663 = vmatpush.xpose.msra.mxu0 %v557
  %664 = vmatpush.xpose.msra.mxu0 %v554
  %665 = vmatpush.xpose.msra.mxu0 %v551
  %666 = vmatpush.xpose.msra.mxu0 %v548
  %667 = vmatpush.xpose.msra.mxu0 %v545
  %668 = vmatpush.xpose.msra.mxu0 %v542
  %669 = vmatpush.xpose.msra.mxu0 %v539
  %670 = vmatpush.xpose.msra.mxu0 %v536
  %671 = vmatpush.xpose.msra.mxu0 %v533
  %672 = vmatpush.xpose.msra.mxu0 %v530
  %673 = vmatpush.xpose.msra.mxu0 %v527
  %674 = vmatpush.xpose.msra.mxu0 %v524
  %675 = vmatmul.f32.gmra.mxu0 %v425
  %v676 = vpop.f32.mrf.mxu0
  %v677 = vadd.f32 %v402, %v676
  %678 = vdwg.mxu0
  %679 = vmatpush.xpose.msra.mxu0 %v617
  %680 = vmatpush.xpose.msra.mxu0 %v614
  %681 = vmatpush.xpose.msra.mxu0 %v611
  %682 = vmatpush.xpose.msra.mxu0 %v608
  %683 = vmatpush.xpose.msra.mxu0 %v605
  %684 = vmatpush.xpose.msra.mxu0 %v602
  %685 = vmatpush.xpose.msra.mxu0 %v599
  %686 = vmatpush.xpose.msra.mxu0 %v596
  %687 = vmatpush.xpose.msra.mxu0 %v593
  %688 = vmatpush.xpose.msra.mxu0 %v590
  %689 = vmatpush.xpose.msra.mxu0 %v587
  %690 = vmatpush.xpose.msra.mxu0 %v584
  %691 = vmatpush.xpose.msra.mxu0 %v581
  %692 = vmatpush.xpose.msra.mxu0 %v578
  %693 = vmatpush.xpose.msra.mxu0 %v575
  %694 = vmatpush.xpose.msra.mxu0 %v572
  %695 = vmatmul.f32.gmra.mxu0 %v425
  %v696 = vpop.f32.mrf.mxu0
  %v697 = vadd.f32 %v422, %v696
  %698 = vdwg.mxu0
  %v699 = vld [vmem:[%s0 + $0x2] sm:$0xff]
  %v700 = vld [vmem:[%s0 + $0xa] sm:$0xff]
  %v701 = vld [vmem:[%s0 + $0x1a] sm:$0xff]
  %v702 = vld [vmem:[%s0 + $0x22] sm:$0xff]
  %v703 = vld [vmem:[%s0 + $0x32] sm:$0xff]
  %v704 = vld [vmem:[%s0 + $0x3a] sm:$0xff]
  %v705 = vld [vmem:[%s0 + $0x4a] sm:$0xff]
  %v706 = vld [vmem:[%s0 + $0x52] sm:$0xff]
  %v707 = vld [vmem:[%s0 + $0x62] sm:$0xff]
  %v708 = vld [vmem:[%s0 + $0x6a] sm:$0xff]
  %v709 = vld [vmem:[%s0 + $0x7a] sm:$0xff]
  %v710 = vld [vmem:[%s0 + $0x82] sm:$0xff]
  %v711 = vld [vmem:[%s0 + $0x92] sm:$0xff]
  %v712 = vld [vmem:[%s0 + $0x9a] sm:$0xff]
  %v713 = vld [vmem:[%s0 + $0xaa] sm:$0xff]
  %v714 = vld [vmem:[%s0 + $0xb2] sm:$0xff]
  %v715 = vld [vmem:[%s0 + $0xc2] sm:$0xff]
  %v716 = vld [vmem:[%s0 + $0xca] sm:$0xff]
  %v717 = vld [vmem:[%s0 + $0xda] sm:$0xff]
  %v718 = vld [vmem:[%s0 + $0xe2] sm:$0xff]
  %v719 = vld [vmem:[%s0 + $0xf2] sm:$0xff]
  %v720 = vld [vmem:[%s0 + $0xfa] sm:$0xff]
  %v721 = vld [vmem:[%s0 + $0x10a] sm:$0xff]
  %v722 = vld [vmem:[%s0 + $0x112] sm:$0xff]
  %v723 = vld [vmem:[%s0 + $0x122] sm:$0xff]
  %v724 = vld [vmem:[%s0 + $0x12a] sm:$0xff]
  %v725 = vld [vmem:[%s0 + $0x13a] sm:$0xff]
  %v726 = vld [vmem:[%s0 + $0x142] sm:$0xff]
  %v727 = vld [vmem:[%s0 + $0x152] sm:$0xff]
  %v728 = vld [vmem:[%s0 + $0x15a] sm:$0xff]
  %v729 = vld [vmem:[%s0 + $0x16a] sm:$0xff]
  %v730 = vld [vmem:[%s0 + $0x172] sm:$0xff]
  %v731 = vld [vmem:[%s0 + $0x1b2] sm:$0xff]
  %v732 = vld [vmem:[%s0 + $0x1ba] sm:$0xff]
  %v733 = vld [vmem:[%s0 + $0x1ca] sm:$0xff]
  %v734 = vld [vmem:[%s0 + $0x1d2] sm:$0xff]
  %v735 = vld [vmem:[%s0 + $0x1e2] sm:$0xff]
  %v736 = vld [vmem:[%s0 + $0x1ea] sm:$0xff]
  %v737 = vld [vmem:[%s0 + $0x1fa] sm:$0xff]
  %v738 = vld [vmem:[%s0 + $0x202] sm:$0xff]
  %v739 = vld [vmem:[%s0 + $0x212] sm:$0xff]
  %v740 = vld [vmem:[%s0 + $0x21a] sm:$0xff]
  %v741 = vld [vmem:[%s0 + $0x22a] sm:$0xff]
  %v742 = vld [vmem:[%s0 + $0x232] sm:$0xff]
  %v743 = vld [vmem:[%s0 + $0x242] sm:$0xff]
  %v744 = vld [vmem:[%s0 + $0x24a] sm:$0xff]
  %v745 = vld [vmem:[%s0 + $0x25a] sm:$0xff]
  %v746 = vld [vmem:[%s0 + $0x262] sm:$0xff]
  %v747 = vld [vmem:[%s0 + $0x272] sm:$0xff]
  %v748 = vld [vmem:[%s0 + $0x27a] sm:$0xff]
  %v749 = vld [vmem:[%s0 + $0x28a] sm:$0xff]
  %v750 = vld [vmem:[%s0 + $0x292] sm:$0xff]
  %v751 = vld [vmem:[%s0 + $0x2a2] sm:$0xff]
  %v752 = vld [vmem:[%s0 + $0x2aa] sm:$0xff]
  %v753 = vld [vmem:[%s0 + $0x2ba] sm:$0xff]
  %v754 = vld [vmem:[%s0 + $0x2c2] sm:$0xff]
  %v755 = vld [vmem:[%s0 + $0x2d2] sm:$0xff]
  %v756 = vld [vmem:[%s0 + $0x2da] sm:$0xff]
  %v757 = vld [vmem:[%s0 + $0x2ea] sm:$0xff]
  %v758 = vld [vmem:[%s0 + $0x2f2] sm:$0xff]
  %v759 = vld [vmem:[%s0 + $0x302] sm:$0xff]
  %v760 = vld [vmem:[%s0 + $0x30a] sm:$0xff]
  %v761 = vld [vmem:[%s0 + $0x31a] sm:$0xff]
  %v762 = vld [vmem:[%s0 + $0x322] sm:$0xff]
  %s763 = scalar_lea.vmem %s1, 16
  %v764 = vld [vmem:[%s763] sm:$0xff]
  %v766 = vsel %vm148, %v764, 0
  %v769 = vsel %vm148, %v699, 0
  %v772 = vsel %vm148, %v700, 0
  %v775 = vsel %vm148, %v701, 0
  %v778 = vsel %vm148, %v702, 0
  %v781 = vsel %vm148, %v703, 0
  %v784 = vsel %vm148, %v704, 0
  %v787 = vsel %vm148, %v705, 0
  %v790 = vsel %vm148, %v706, 0
  %v793 = vsel %vm148, %v707, 0
  %v796 = vsel %vm148, %v708, 0
  %v799 = vsel %vm148, %v709, 0
  %v802 = vsel %vm148, %v710, 0
  %v805 = vsel %vm148, %v711, 0
  %v808 = vsel %vm148, %v712, 0
  %v811 = vsel %vm148, %v713, 0
  %v814 = vsel %vm148, %v714, 0
  %v817 = vsel %vm148, %v715, 0
  %v820 = vsel %vm148, %v716, 0
  %v823 = vsel %vm148, %v717, 0
  %v826 = vsel %vm148, %v718, 0
  %v829 = vsel %vm148, %v719, 0
  %v832 = vsel %vm148, %v720, 0
  %v835 = vsel %vm148, %v721, 0
  %v838 = vsel %vm148, %v722, 0
  %v841 = vsel %vm148, %v723, 0
  %v844 = vsel %vm148, %v724, 0
  %v847 = vsel %vm148, %v725, 0
  %v850 = vsel %vm148, %v726, 0
  %v853 = vsel %vm148, %v727, 0
  %v856 = vsel %vm148, %v728, 0
  %v859 = vsel %vm148, %v729, 0
  %v862 = vsel %vm148, %v730, 0
  %v865 = vsel %vm148, %v731, 0
  %v868 = vsel %vm148, %v732, 0
  %v871 = vsel %vm148, %v733, 0
  %v874 = vsel %vm148, %v734, 0
  %v877 = vsel %vm148, %v735, 0
  %v880 = vsel %vm148, %v736, 0
  %v883 = vsel %vm148, %v737, 0
  %v886 = vsel %vm148, %v738, 0
  %v889 = vsel %vm148, %v739, 0
  %v892 = vsel %vm148, %v740, 0
  %v895 = vsel %vm148, %v741, 0
  %v898 = vsel %vm148, %v742, 0
  %v901 = vsel %vm148, %v743, 0
  %v904 = vsel %vm148, %v744, 0
  %v907 = vsel %vm148, %v745, 0
  %v910 = vsel %vm148, %v746, 0
  %v913 = vsel %vm148, %v747, 0
  %v916 = vsel %vm148, %v748, 0
  %v919 = vsel %vm148, %v749, 0
  %v922 = vsel %vm148, %v750, 0
  %v925 = vsel %vm148, %v751, 0
  %v928 = vsel %vm148, %v752, 0
  %v931 = vsel %vm148, %v753, 0
  %v934 = vsel %vm148, %v754, 0
  %v937 = vsel %vm148, %v755, 0
  %v940 = vsel %vm148, %v756, 0
  %v943 = vsel %vm148, %v757, 0
  %v946 = vsel %vm148, %v758, 0
  %v949 = vsel %vm148, %v759, 0
  %v952 = vsel %vm148, %v760, 0
  %v955 = vsel %vm148, %v761, 0
  %v958 = vsel %vm148, %v762, 0
  %960 = vmatpush.xpose.msra.mxu0 %v814
  %961 = vmatpush.xpose.msra.mxu0 %v811
  %962 = vmatpush.xpose.msra.mxu0 %v808
  %963 = vmatpush.xpose.msra.mxu0 %v805
  %964 = vmatpush.xpose.msra.mxu0 %v802
  %965 = vmatpush.xpose.msra.mxu0 %v799
  %966 = vmatpush.xpose.msra.mxu0 %v796
  %967 = vmatpush.xpose.msra.mxu0 %v793
  %968 = vmatpush.xpose.msra.mxu0 %v790
  %969 = vmatpush.xpose.msra.mxu0 %v787
  %970 = vmatpush.xpose.msra.mxu0 %v784
  %971 = vmatpush.xpose.msra.mxu0 %v781
  %972 = vmatpush.xpose.msra.mxu0 %v778
  %973 = vmatpush.xpose.msra.mxu0 %v775
  %974 = vmatpush.xpose.msra.mxu0 %v772
  %975 = vmatpush.xpose.msra.mxu0 %v769
  %976 = vmatmul.f32.gmra.mxu0 %v766
  %v977 = vpop.f32.mrf.mxu0
  %v978 = vadd.f32 0.0, %v977
  %979 = vdwg.mxu0
  %980 = vmatpush.xpose.msra.mxu0 %v862
  %981 = vmatpush.xpose.msra.mxu0 %v859
  %982 = vmatpush.xpose.msra.mxu0 %v856
  %983 = vmatpush.xpose.msra.mxu0 %v853
  %984 = vmatpush.xpose.msra.mxu0 %v850
  %985 = vmatpush.xpose.msra.mxu0 %v847
  %986 = vmatpush.xpose.msra.mxu0 %v844
  %987 = vmatpush.xpose.msra.mxu0 %v841
  %988 = vmatpush.xpose.msra.mxu0 %v838
  %989 = vmatpush.xpose.msra.mxu0 %v835
  %990 = vmatpush.xpose.msra.mxu0 %v832
  %991 = vmatpush.xpose.msra.mxu0 %v829
  %992 = vmatpush.xpose.msra.mxu0 %v826
  %993 = vmatpush.xpose.msra.mxu0 %v823
  %994 = vmatpush.xpose.msra.mxu0 %v820
  %995 = vmatpush.xpose.msra.mxu0 %v817
  %996 = vmatmul.f32.gmra.mxu0 %v766
  %v997 = vpop.f32.mrf.mxu0
  %v998 = vadd.f32 0.0, %v997
  %999 = vdwg.mxu0
  %1000 = vmatpush.xpose.msra.mxu0 %v910
  %1001 = vmatpush.xpose.msra.mxu0 %v907
  %1002 = vmatpush.xpose.msra.mxu0 %v904
  %1003 = vmatpush.xpose.msra.mxu0 %v901
  %1004 = vmatpush.xpose.msra.mxu0 %v898
  %1005 = vmatpush.xpose.msra.mxu0 %v895
  %1006 = vmatpush.xpose.msra.mxu0 %v892
  %1007 = vmatpush.xpose.msra.mxu0 %v889
  %1008 = vmatpush.xpose.msra.mxu0 %v886
  %1009 = vmatpush.xpose.msra.mxu0 %v883
  %1010 = vmatpush.xpose.msra.mxu0 %v880
  %1011 = vmatpush.xpose.msra.mxu0 %v877
  %1012 = vmatpush.xpose.msra.mxu0 %v874
  %1013 = vmatpush.xpose.msra.mxu0 %v871
  %1014 = vmatpush.xpose.msra.mxu0 %v868
  %1015 = vmatpush.xpose.msra.mxu0 %v865
  %1016 = vmatmul.f32.gmra.mxu0 %v766
  %v1017 = vpop.f32.mrf.mxu0
  %v1018 = vadd.f32 0.0, %v1017
  %1019 = vdwg.mxu0
  %1020 = vmatpush.xpose.msra.mxu0 %v958
  %1021 = vmatpush.xpose.msra.mxu0 %v955
  %1022 = vmatpush.xpose.msra.mxu0 %v952
  %1023 = vmatpush.xpose.msra.mxu0 %v949
  %1024 = vmatpush.xpose.msra.mxu0 %v946
  %1025 = vmatpush.xpose.msra.mxu0 %v943
  %1026 = vmatpush.xpose.msra.mxu0 %v940
  %1027 = vmatpush.xpose.msra.mxu0 %v937
  %1028 = vmatpush.xpose.msra.mxu0 %v934
  %1029 = vmatpush.xpose.msra.mxu0 %v931
  %1030 = vmatpush.xpose.msra.mxu0 %v928
  %1031 = vmatpush.xpose.msra.mxu0 %v925
  %1032 = vmatpush.xpose.msra.mxu0 %v922
  %1033 = vmatpush.xpose.msra.mxu0 %v919
  %1034 = vmatpush.xpose.msra.mxu0 %v916
  %1035 = vmatpush.xpose.msra.mxu0 %v913
  %1036 = vmatmul.f32.gmra.mxu0 %v766
  %v1037 = vpop.f32.mrf.mxu0
  %v1038 = vadd.f32 0.0, %v1037
  %1039 = vdwg.mxu0
  %v1040 = vadd.f32 %v637, %v978
  %v1041 = vadd.f32 %v657, %v998
  %v1042 = vadd.f32 %v677, %v1018
  %v1043 = vadd.f32 %v697, %v1038
  %s1044 = scalar_lea.vmem %s0, 24
  %v1045 = vld [vmem:[%s1044] sm:$0xff]
  %v1046 = vld [vmem:[%s1044 + $0x8] sm:$0xff]
  %v1047 = vld [vmem:[%s1044 + $0x18] sm:$0xff]
  %v1048 = vld [vmem:[%s1044 + $0x20] sm:$0xff]
  %v1049 = vld [vmem:[%s1044 + $0x30] sm:$0xff]
  %v1050 = vld [vmem:[%s1044 + $0x38] sm:$0xff]
  %v1051 = vld [vmem:[%s1044 + $0x48] sm:$0xff]
  %v1052 = vld [vmem:[%s1044 + $0x50] sm:$0xff]
  %v1053 = vld [vmem:[%s1044 + $0x60] sm:$0xff]
  %v1054 = vld [vmem:[%s1044 + $0x68] sm:$0xff]
  %v1055 = vld [vmem:[%s1044 + $0x78] sm:$0xff]
  %v1056 = vld [vmem:[%s1044 + $0x80] sm:$0xff]
  %v1057 = vld [vmem:[%s1044 + $0x90] sm:$0xff]
  %v1058 = vld [vmem:[%s1044 + $0x98] sm:$0xff]
  %v1059 = vld [vmem:[%s1044 + $0xa8] sm:$0xff]
  %v1060 = vld [vmem:[%s1044 + $0xb0] sm:$0xff]
  %v1061 = vld [vmem:[%s1044 + $0xc0] sm:$0xff]
  %v1062 = vld [vmem:[%s1044 + $0xc8] sm:$0xff]
  %v1063 = vld [vmem:[%s1044 + $0xd8] sm:$0xff]
  %v1064 = vld [vmem:[%s1044 + $0xe0] sm:$0xff]
  %v1065 = vld [vmem:[%s1044 + $0xf0] sm:$0xff]
  %v1066 = vld [vmem:[%s1044 + $0xf8] sm:$0xff]
  %v1067 = vld [vmem:[%s1044 + $0x108] sm:$0xff]
  %v1068 = vld [vmem:[%s1044 + $0x110] sm:$0xff]
  %v1069 = vld [vmem:[%s1044 + $0x120] sm:$0xff]
  %v1070 = vld [vmem:[%s1044 + $0x128] sm:$0xff]
  %v1071 = vld [vmem:[%s1044 + $0x138] sm:$0xff]
  %v1072 = vld [vmem:[%s1044 + $0x140] sm:$0xff]
  %v1073 = vld [vmem:[%s1044 + $0x150] sm:$0xff]
  %v1074 = vld [vmem:[%s1044 + $0x158] sm:$0xff]
  %v1075 = vld [vmem:[%s1044 + $0x168] sm:$0xff]
  %v1076 = vld [vmem:[%s1044 + $0x170] sm:$0xff]
  %v1077 = vld [vmem:[%s1044 + $0x1b0] sm:$0xff]
  %v1078 = vld [vmem:[%s1044 + $0x1b8] sm:$0xff]
  %v1079 = vld [vmem:[%s1044 + $0x1c8] sm:$0xff]
  %v1080 = vld [vmem:[%s1044 + $0x1d0] sm:$0xff]
  %v1081 = vld [vmem:[%s1044 + $0x1e0] sm:$0xff]
  %v1082 = vld [vmem:[%s1044 + $0x1e8] sm:$0xff]
  %v1083 = vld [vmem:[%s1044 + $0x1f8] sm:$0xff]
  %v1084 = vld [vmem:[%s1044 + $0x200] sm:$0xff]
  %v1085 = vld [vmem:[%s1044 + $0x210] sm:$0xff]
  %v1086 = vld [vmem:[%s1044 + $0x218] sm:$0xff]
  %v1087 = vld [vmem:[%s1044 + $0x228] sm:$0xff]
  %v1088 = vld [vmem:[%s1044 + $0x230] sm:$0xff]
  %v1089 = vld [vmem:[%s1044 + $0x240] sm:$0xff]
  %v1090 = vld [vmem:[%s1044 + $0x248] sm:$0xff]
  %v1091 = vld [vmem:[%s1044 + $0x258] sm:$0xff]
  %v1092 = vld [vmem:[%s1044 + $0x260] sm:$0xff]
  %v1093 = vld [vmem:[%s1044 + $0x270] sm:$0xff]
  %v1094 = vld [vmem:[%s1044 + $0x278] sm:$0xff]
  %v1095 = vld [vmem:[%s1044 + $0x288] sm:$0xff]
  %v1096 = vld [vmem:[%s1044 + $0x290] sm:$0xff]
  %v1097 = vld [vmem:[%s1044 + $0x2a0] sm:$0xff]
  %v1098 = vld [vmem:[%s1044 + $0x2a8] sm:$0xff]
  %v1099 = vld [vmem:[%s1044 + $0x2b8] sm:$0xff]
  %v1100 = vld [vmem:[%s1044 + $0x2c0] sm:$0xff]
  %v1101 = vld [vmem:[%s1044 + $0x2d0] sm:$0xff]
  %v1102 = vld [vmem:[%s1044 + $0x2d8] sm:$0xff]
  %v1103 = vld [vmem:[%s1044 + $0x2e8] sm:$0xff]
  %v1104 = vld [vmem:[%s1044 + $0x2f0] sm:$0xff]
  %v1105 = vld [vmem:[%s1044 + $0x300] sm:$0xff]
  %v1106 = vld [vmem:[%s1044 + $0x308] sm:$0xff]
  %v1107 = vld [vmem:[%s1044 + $0x318] sm:$0xff]
  %v1108 = vld [vmem:[%s1044 + $0x320] sm:$0xff]
  %s1109 = scalar_lea.vmem %s1, 24
  %v1110 = vld [vmem:[%s1109] sm:$0xff]
  %v1112 = vsel %vm148, %v1110, 0
  %v1115 = vsel %vm148, %v1045, 0
  %v1118 = vsel %vm148, %v1046, 0
  %v1121 = vsel %vm148, %v1047, 0
  %v1124 = vsel %vm148, %v1048, 0
  %v1127 = vsel %vm148, %v1049, 0
  %v1130 = vsel %vm148, %v1050, 0
  %v1133 = vsel %vm148, %v1051, 0
  %v1136 = vsel %vm148, %v1052, 0
  %v1139 = vsel %vm148, %v1053, 0
  %v1142 = vsel %vm148, %v1054, 0
  %v1145 = vsel %vm148, %v1055, 0
  %v1148 = vsel %vm148, %v1056, 0
  %v1151 = vsel %vm148, %v1057, 0
  %v1154 = vsel %vm148, %v1058, 0
  %v1157 = vsel %vm148, %v1059, 0
  %v1160 = vsel %vm148, %v1060, 0
  %v1163 = vsel %vm148, %v1061, 0
  %v1166 = vsel %vm148, %v1062, 0
  %v1169 = vsel %vm148, %v1063, 0
  %v1172 = vsel %vm148, %v1064, 0
  %v1175 = vsel %vm148, %v1065, 0
  %v1178 = vsel %vm148, %v1066, 0
  %v1181 = vsel %vm148, %v1067, 0
  %v1184 = vsel %vm148, %v1068, 0
  %v1187 = vsel %vm148, %v1069, 0
  %v1190 = vsel %vm148, %v1070, 0
  %v1193 = vsel %vm148, %v1071, 0
  %v1196 = vsel %vm148, %v1072, 0
  %v1199 = vsel %vm148, %v1073, 0
  %v1202 = vsel %vm148, %v1074, 0
  %v1205 = vsel %vm148, %v1075, 0
  %v1208 = vsel %vm148, %v1076, 0
  %v1211 = vsel %vm148, %v1077, 0
  %v1214 = vsel %vm148, %v1078, 0
  %v1217 = vsel %vm148, %v1079, 0
  %v1220 = vsel %vm148, %v1080, 0
  %v1223 = vsel %vm148, %v1081, 0
  %v1226 = vsel %vm148, %v1082, 0
  %v1229 = vsel %vm148, %v1083, 0
  %v1232 = vsel %vm148, %v1084, 0
  %v1235 = vsel %vm148, %v1085, 0
  %v1238 = vsel %vm148, %v1086, 0
  %v1241 = vsel %vm148, %v1087, 0
  %v1244 = vsel %vm148, %v1088, 0
  %v1247 = vsel %vm148, %v1089, 0
  %v1250 = vsel %vm148, %v1090, 0
  %v1253 = vsel %vm148, %v1091, 0
  %v1256 = vsel %vm148, %v1092, 0
  %v1259 = vsel %vm148, %v1093, 0
  %v1262 = vsel %vm148, %v1094, 0
  %v1265 = vsel %vm148, %v1095, 0
  %v1268 = vsel %vm148, %v1096, 0
  %v1271 = vsel %vm148, %v1097, 0
  %v1274 = vsel %vm148, %v1098, 0
  %v1277 = vsel %vm148, %v1099, 0
  %v1280 = vsel %vm148, %v1100, 0
  %v1283 = vsel %vm148, %v1101, 0
  %v1286 = vsel %vm148, %v1102, 0
  %v1289 = vsel %vm148, %v1103, 0
  %v1292 = vsel %vm148, %v1104, 0
  %v1295 = vsel %vm148, %v1105, 0
  %v1298 = vsel %vm148, %v1106, 0
  %v1301 = vsel %vm148, %v1107, 0
  %v1304 = vsel %vm148, %v1108, 0
  %1306 = vmatpush.xpose.msra.mxu0 %v1160
  %1307 = vmatpush.xpose.msra.mxu0 %v1157
  %1308 = vmatpush.xpose.msra.mxu0 %v1154
  %1309 = vmatpush.xpose.msra.mxu0 %v1151
  %1310 = vmatpush.xpose.msra.mxu0 %v1148
  %1311 = vmatpush.xpose.msra.mxu0 %v1145
  %1312 = vmatpush.xpose.msra.mxu0 %v1142
  %1313 = vmatpush.xpose.msra.mxu0 %v1139
  %1314 = vmatpush.xpose.msra.mxu0 %v1136
  %1315 = vmatpush.xpose.msra.mxu0 %v1133
  %1316 = vmatpush.xpose.msra.mxu0 %v1130
  %1317 = vmatpush.xpose.msra.mxu0 %v1127
  %1318 = vmatpush.xpose.msra.mxu0 %v1124
  %1319 = vmatpush.xpose.msra.mxu0 %v1121
  %1320 = vmatpush.xpose.msra.mxu0 %v1118
  %1321 = vmatpush.xpose.msra.mxu0 %v1115
  %1322 = vmatmul.f32.gmra.mxu0 %v1112
  %v1323 = vpop.f32.mrf.mxu0
  %v1324 = vadd.f32 0.0, %v1323
  %1325 = vdwg.mxu0
  %1326 = vmatpush.xpose.msra.mxu0 %v1208
  %1327 = vmatpush.xpose.msra.mxu0 %v1205
  %1328 = vmatpush.xpose.msra.mxu0 %v1202
  %1329 = vmatpush.xpose.msra.mxu0 %v1199
  %1330 = vmatpush.xpose.msra.mxu0 %v1196
  %1331 = vmatpush.xpose.msra.mxu0 %v1193
  %1332 = vmatpush.xpose.msra.mxu0 %v1190
  %1333 = vmatpush.xpose.msra.mxu0 %v1187
  %1334 = vmatpush.xpose.msra.mxu0 %v1184
  %1335 = vmatpush.xpose.msra.mxu0 %v1181
  %1336 = vmatpush.xpose.msra.mxu0 %v1178
  %1337 = vmatpush.xpose.msra.mxu0 %v1175
  %1338 = vmatpush.xpose.msra.mxu0 %v1172
  %1339 = vmatpush.xpose.msra.mxu0 %v1169
  %1340 = vmatpush.xpose.msra.mxu0 %v1166
  %1341 = vmatpush.xpose.msra.mxu0 %v1163
  %1342 = vmatmul.f32.gmra.mxu0 %v1112
  %v1343 = vpop.f32.mrf.mxu0
  %v1344 = vadd.f32 0.0, %v1343
  %1345 = vdwg.mxu0
  %1346 = vmatpush.xpose.msra.mxu0 %v1256
  %1347 = vmatpush.xpose.msra.mxu0 %v1253
  %1348 = vmatpush.xpose.msra.mxu0 %v1250
  %1349 = vmatpush.xpose.msra.mxu0 %v1247
  %1350 = vmatpush.xpose.msra.mxu0 %v1244
  %1351 = vmatpush.xpose.msra.mxu0 %v1241
  %1352 = vmatpush.xpose.msra.mxu0 %v1238
  %1353 = vmatpush.xpose.msra.mxu0 %v1235
  %1354 = vmatpush.xpose.msra.mxu0 %v1232
  %1355 = vmatpush.xpose.msra.mxu0 %v1229
  %1356 = vmatpush.xpose.msra.mxu0 %v1226
  %1357 = vmatpush.xpose.msra.mxu0 %v1223
  %1358 = vmatpush.xpose.msra.mxu0 %v1220
  %1359 = vmatpush.xpose.msra.mxu0 %v1217
  %1360 = vmatpush.xpose.msra.mxu0 %v1214
  %1361 = vmatpush.xpose.msra.mxu0 %v1211
  %1362 = vmatmul.f32.gmra.mxu0 %v1112
  %v1363 = vpop.f32.mrf.mxu0
  %v1364 = vadd.f32 0.0, %v1363
  %1365 = vdwg.mxu0
  %1366 = vmatpush.xpose.msra.mxu0 %v1304
  %1367 = vmatpush.xpose.msra.mxu0 %v1301
  %1368 = vmatpush.xpose.msra.mxu0 %v1298
  %1369 = vmatpush.xpose.msra.mxu0 %v1295
  %1370 = vmatpush.xpose.msra.mxu0 %v1292
  %1371 = vmatpush.xpose.msra.mxu0 %v1289
  %1372 = vmatpush.xpose.msra.mxu0 %v1286
  %1373 = vmatpush.xpose.msra.mxu0 %v1283
  %1374 = vmatpush.xpose.msra.mxu0 %v1280
  %1375 = vmatpush.xpose.msra.mxu0 %v1277
  %1376 = vmatpush.xpose.msra.mxu0 %v1274
  %1377 = vmatpush.xpose.msra.mxu0 %v1271
  %1378 = vmatpush.xpose.msra.mxu0 %v1268
  %1379 = vmatpush.xpose.msra.mxu0 %v1265
  %1380 = vmatpush.xpose.msra.mxu0 %v1262
  %1381 = vmatpush.xpose.msra.mxu0 %v1259
  %1382 = vmatmul.f32.gmra.mxu0 %v1112
  %v1383 = vpop.f32.mrf.mxu0
  %v1384 = vadd.f32 0.0, %v1383
  %1385 = vdwg.mxu0
  %v1386 = vadd.f32 %v1040, %v1324
  %v1387 = vadd.f32 %v1041, %v1344
  %v1388 = vadd.f32 %v1042, %v1364
  %v1389 = vadd.f32 %v1043, %v1384
  %v1390 = vld [vmem:[%s1044 + $0x1] sm:$0xff]
  %v1391 = vld [vmem:[%s1044 + $0x9] sm:$0xff]
  %v1392 = vld [vmem:[%s1044 + $0x19] sm:$0xff]
  %v1393 = vld [vmem:[%s1044 + $0x21] sm:$0xff]
  %v1394 = vld [vmem:[%s1044 + $0x31] sm:$0xff]
  %v1395 = vld [vmem:[%s1044 + $0x39] sm:$0xff]
  %v1396 = vld [vmem:[%s1044 + $0x49] sm:$0xff]
  %v1397 = vld [vmem:[%s1044 + $0x51] sm:$0xff]
  %v1398 = vld [vmem:[%s1044 + $0x61] sm:$0xff]
  %v1399 = vld [vmem:[%s1044 + $0x69] sm:$0xff]
  %v1400 = vld [vmem:[%s1044 + $0x79] sm:$0xff]
  %v1401 = vld [vmem:[%s1044 + $0x81] sm:$0xff]
  %v1402 = vld [vmem:[%s1044 + $0x91] sm:$0xff]
  %v1403 = vld [vmem:[%s1044 + $0x99] sm:$0xff]
  %v1404 = vld [vmem:[%s1044 + $0xa9] sm:$0xff]
  %v1405 = vld [vmem:[%s1044 + $0xb1] sm:$0xff]
  %v1406 = vld [vmem:[%s1044 + $0xc1] sm:$0xff]
  %v1407 = vld [vmem:[%s1044 + $0xc9] sm:$0xff]
  %v1408 = vld [vmem:[%s1044 + $0xd9] sm:$0xff]
  %v1409 = vld [vmem:[%s1044 + $0xe1] sm:$0xff]
  %v1410 = vld [vmem:[%s1044 + $0xf1] sm:$0xff]
  %v1411 = vld [vmem:[%s1044 + $0xf9] sm:$0xff]
  %v1412 = vld [vmem:[%s1044 + $0x109] sm:$0xff]
  %v1413 = vld [vmem:[%s1044 + $0x111] sm:$0xff]
  %v1414 = vld [vmem:[%s1044 + $0x121] sm:$0xff]
  %v1415 = vld [vmem:[%s1044 + $0x129] sm:$0xff]
  %v1416 = vld [vmem:[%s1044 + $0x139] sm:$0xff]
  %v1417 = vld [vmem:[%s1044 + $0x141] sm:$0xff]
  %v1418 = vld [vmem:[%s1044 + $0x151] sm:$0xff]
  %v1419 = vld [vmem:[%s1044 + $0x159] sm:$0xff]
  %v1420 = vld [vmem:[%s1044 + $0x169] sm:$0xff]
  %v1421 = vld [vmem:[%s1044 + $0x171] sm:$0xff]
  %v1422 = vld [vmem:[%s1044 + $0x1b1] sm:$0xff]
  %v1423 = vld [vmem:[%s1044 + $0x1b9] sm:$0xff]
  %v1424 = vld [vmem:[%s1044 + $0x1c9] sm:$0xff]
  %v1425 = vld [vmem:[%s1044 + $0x1d1] sm:$0xff]
  %v1426 = vld [vmem:[%s1044 + $0x1e1] sm:$0xff]
  %v1427 = vld [vmem:[%s1044 + $0x1e9] sm:$0xff]
  %v1428 = vld [vmem:[%s1044 + $0x1f9] sm:$0xff]
  %v1429 = vld [vmem:[%s1044 + $0x201] sm:$0xff]
  %v1430 = vld [vmem:[%s1044 + $0x211] sm:$0xff]
  %v1431 = vld [vmem:[%s1044 + $0x219] sm:$0xff]
  %v1432 = vld [vmem:[%s1044 + $0x229] sm:$0xff]
  %v1433 = vld [vmem:[%s1044 + $0x231] sm:$0xff]
  %v1434 = vld [vmem:[%s1044 + $0x241] sm:$0xff]
  %v1435 = vld [vmem:[%s1044 + $0x249] sm:$0xff]
  %v1436 = vld [vmem:[%s1044 + $0x259] sm:$0xff]
  %v1437 = vld [vmem:[%s1044 + $0x261] sm:$0xff]
  %v1438 = vld [vmem:[%s1044 + $0x271] sm:$0xff]
  %v1439 = vld [vmem:[%s1044 + $0x279] sm:$0xff]
  %v1440 = vld [vmem:[%s1044 + $0x289] sm:$0xff]
  %v1441 = vld [vmem:[%s1044 + $0x291] sm:$0xff]
  %v1442 = vld [vmem:[%s1044 + $0x2a1] sm:$0xff]
  %v1443 = vld [vmem:[%s1044 + $0x2a9] sm:$0xff]
  %v1444 = vld [vmem:[%s1044 + $0x2b9] sm:$0xff]
  %v1445 = vld [vmem:[%s1044 + $0x2c1] sm:$0xff]
  %v1446 = vld [vmem:[%s1044 + $0x2d1] sm:$0xff]
  %v1447 = vld [vmem:[%s1044 + $0x2d9] sm:$0xff]
  %v1448 = vld [vmem:[%s1044 + $0x2e9] sm:$0xff]
  %v1449 = vld [vmem:[%s1044 + $0x2f1] sm:$0xff]
  %v1450 = vld [vmem:[%s1044 + $0x301] sm:$0xff]
  %v1451 = vld [vmem:[%s1044 + $0x309] sm:$0xff]
  %v1452 = vld [vmem:[%s1044 + $0x319] sm:$0xff]
  %v1453 = vld [vmem:[%s1044 + $0x321] sm:$0xff]
  %s1454 = scalar_lea.vmem %s1, 32
  %v1455 = vld [vmem:[%s1454] sm:$0xff]
  %v1457 = vsel %vm148, %v1455, 0
  %v1460 = vsel %vm148, %v1390, 0
  %v1463 = vsel %vm148, %v1391, 0
  %v1466 = vsel %vm148, %v1392, 0
  %v1469 = vsel %vm148, %v1393, 0
  %v1472 = vsel %vm148, %v1394, 0
  %v1475 = vsel %vm148, %v1395, 0
  %v1478 = vsel %vm148, %v1396, 0
  %v1481 = vsel %vm148, %v1397, 0
  %v1484 = vsel %vm148, %v1398, 0
  %v1487 = vsel %vm148, %v1399, 0
  %v1490 = vsel %vm148, %v1400, 0
  %v1493 = vsel %vm148, %v1401, 0
  %v1496 = vsel %vm148, %v1402, 0
  %v1499 = vsel %vm148, %v1403, 0
  %v1502 = vsel %vm148, %v1404, 0
  %v1505 = vsel %vm148, %v1405, 0
  %v1508 = vsel %vm148, %v1406, 0
  %v1511 = vsel %vm148, %v1407, 0
  %v1514 = vsel %vm148, %v1408, 0
  %v1517 = vsel %vm148, %v1409, 0
  %v1520 = vsel %vm148, %v1410, 0
  %v1523 = vsel %vm148, %v1411, 0
  %v1526 = vsel %vm148, %v1412, 0
  %v1529 = vsel %vm148, %v1413, 0
  %v1532 = vsel %vm148, %v1414, 0
  %v1535 = vsel %vm148, %v1415, 0
  %v1538 = vsel %vm148, %v1416, 0
  %v1541 = vsel %vm148, %v1417, 0
  %v1544 = vsel %vm148, %v1418, 0
  %v1547 = vsel %vm148, %v1419, 0
  %v1550 = vsel %vm148, %v1420, 0
  %v1553 = vsel %vm148, %v1421, 0
  %v1556 = vsel %vm148, %v1422, 0
  %v1559 = vsel %vm148, %v1423, 0
  %v1562 = vsel %vm148, %v1424, 0
  %v1565 = vsel %vm148, %v1425, 0
  %v1568 = vsel %vm148, %v1426, 0
  %v1571 = vsel %vm148, %v1427, 0
  %v1574 = vsel %vm148, %v1428, 0
  %v1577 = vsel %vm148, %v1429, 0
  %v1580 = vsel %vm148, %v1430, 0
  %v1583 = vsel %vm148, %v1431, 0
  %v1586 = vsel %vm148, %v1432, 0
  %v1589 = vsel %vm148, %v1433, 0
  %v1592 = vsel %vm148, %v1434, 0
  %v1595 = vsel %vm148, %v1435, 0
  %v1598 = vsel %vm148, %v1436, 0
  %v1601 = vsel %vm148, %v1437, 0
  %v1604 = vsel %vm148, %v1438, 0
  %v1607 = vsel %vm148, %v1439, 0
  %v1610 = vsel %vm148, %v1440, 0
  %v1613 = vsel %vm148, %v1441, 0
  %v1616 = vsel %vm148, %v1442, 0
  %v1619 = vsel %vm148, %v1443, 0
  %v1622 = vsel %vm148, %v1444, 0
  %v1625 = vsel %vm148, %v1445, 0
  %v1628 = vsel %vm148, %v1446, 0
  %v1631 = vsel %vm148, %v1447, 0
  %v1634 = vsel %vm148, %v1448, 0
  %v1637 = vsel %vm148, %v1449, 0
  %v1640 = vsel %vm148, %v1450, 0
  %v1643 = vsel %vm148, %v1451, 0
  %v1646 = vsel %vm148, %v1452, 0
  %v1649 = vsel %vm148, %v1453, 0
  %1651 = vmatpush.xpose.msra.mxu0 %v1505
  %1652 = vmatpush.xpose.msra.mxu0 %v1502
  %1653 = vmatpush.xpose.msra.mxu0 %v1499
  %1654 = vmatpush.xpose.msra.mxu0 %v1496
  %1655 = vmatpush.xpose.msra.mxu0 %v1493
  %1656 = vmatpush.xpose.msra.mxu0 %v1490
  %1657 = vmatpush.xpose.msra.mxu0 %v1487
  %1658 = vmatpush.xpose.msra.mxu0 %v1484
  %1659 = vmatpush.xpose.msra.mxu0 %v1481
  %1660 = vmatpush.xpose.msra.mxu0 %v1478
  %1661 = vmatpush.xpose.msra.mxu0 %v1475
  %1662 = vmatpush.xpose.msra.mxu0 %v1472
  %1663 = vmatpush.xpose.msra.mxu0 %v1469
  %1664 = vmatpush.xpose.msra.mxu0 %v1466
  %1665 = vmatpush.xpose.msra.mxu0 %v1463
  %1666 = vmatpush.xpose.msra.mxu0 %v1460
  %1667 = vmatmul.f32.gmra.mxu0 %v1457
  %v1668 = vpop.f32.mrf.mxu0
  %v1669 = vadd.f32 0.0, %v1668
  %1670 = vdwg.mxu0
  %1671 = vmatpush.xpose.msra.mxu0 %v1553
  %1672 = vmatpush.xpose.msra.mxu0 %v1550
  %1673 = vmatpush.xpose.msra.mxu0 %v1547
  %1674 = vmatpush.xpose.msra.mxu0 %v1544
  %1675 = vmatpush.xpose.msra.mxu0 %v1541
  %1676 = vmatpush.xpose.msra.mxu0 %v1538
  %1677 = vmatpush.xpose.msra.mxu0 %v1535
  %1678 = vmatpush.xpose.msra.mxu0 %v1532
  %1679 = vmatpush.xpose.msra.mxu0 %v1529
  %1680 = vmatpush.xpose.msra.mxu0 %v1526
  %1681 = vmatpush.xpose.msra.mxu0 %v1523
  %1682 = vmatpush.xpose.msra.mxu0 %v1520
  %1683 = vmatpush.xpose.msra.mxu0 %v1517
  %1684 = vmatpush.xpose.msra.mxu0 %v1514
  %1685 = vmatpush.xpose.msra.mxu0 %v1511
  %1686 = vmatpush.xpose.msra.mxu0 %v1508
  %1687 = vmatmul.f32.gmra.mxu0 %v1457
  %v1688 = vpop.f32.mrf.mxu0
  %v1689 = vadd.f32 0.0, %v1688
  %1690 = vdwg.mxu0
  %1691 = vmatpush.xpose.msra.mxu0 %v1601
  %1692 = vmatpush.xpose.msra.mxu0 %v1598
  %1693 = vmatpush.xpose.msra.mxu0 %v1595
  %1694 = vmatpush.xpose.msra.mxu0 %v1592
  %1695 = vmatpush.xpose.msra.mxu0 %v1589
  %1696 = vmatpush.xpose.msra.mxu0 %v1586
  %1697 = vmatpush.xpose.msra.mxu0 %v1583
  %1698 = vmatpush.xpose.msra.mxu0 %v1580
  %1699 = vmatpush.xpose.msra.mxu0 %v1577
  %1700 = vmatpush.xpose.msra.mxu0 %v1574
  %1701 = vmatpush.xpose.msra.mxu0 %v1571
  %1702 = vmatpush.xpose.msra.mxu0 %v1568
  %1703 = vmatpush.xpose.msra.mxu0 %v1565
  %1704 = vmatpush.xpose.msra.mxu0 %v1562
  %1705 = vmatpush.xpose.msra.mxu0 %v1559
  %1706 = vmatpush.xpose.msra.mxu0 %v1556
  %1707 = vmatmul.f32.gmra.mxu0 %v1457
  %v1708 = vpop.f32.mrf.mxu0
  %v1709 = vadd.f32 0.0, %v1708
  %1710 = vdwg.mxu0
  %1711 = vmatpush.xpose.msra.mxu0 %v1649
  %1712 = vmatpush.xpose.msra.mxu0 %v1646
  %1713 = vmatpush.xpose.msra.mxu0 %v1643
  %1714 = vmatpush.xpose.msra.mxu0 %v1640
  %1715 = vmatpush.xpose.msra.mxu0 %v1637
  %1716 = vmatpush.xpose.msra.mxu0 %v1634
  %1717 = vmatpush.xpose.msra.mxu0 %v1631
  %1718 = vmatpush.xpose.msra.mxu0 %v1628
  %1719 = vmatpush.xpose.msra.mxu0 %v1625
  %1720 = vmatpush.xpose.msra.mxu0 %v1622
  %1721 = vmatpush.xpose.msra.mxu0 %v1619
  %1722 = vmatpush.xpose.msra.mxu0 %v1616
  %1723 = vmatpush.xpose.msra.mxu0 %v1613
  %1724 = vmatpush.xpose.msra.mxu0 %v1610
  %1725 = vmatpush.xpose.msra.mxu0 %v1607
  %1726 = vmatpush.xpose.msra.mxu0 %v1604
  %1727 = vmatmul.f32.gmra.mxu0 %v1457
  %v1728 = vpop.f32.mrf.mxu0
  %v1729 = vadd.f32 0.0, %v1728
  %1730 = vdwg.mxu0
  %v1731 = vadd.f32 %v1386, %v1669
  %v1732 = vadd.f32 %v1387, %v1689
  %v1733 = vadd.f32 %v1388, %v1709
  %v1734 = vadd.f32 %v1389, %v1729
  %v1735 = vld [vmem:[%s1044 + $0x2] sm:$0xff]
  %v1736 = vld [vmem:[%s1044 + $0xa] sm:$0xff]
  %v1737 = vld [vmem:[%s1044 + $0x1a] sm:$0xff]
  %v1738 = vld [vmem:[%s1044 + $0x22] sm:$0xff]
  %v1739 = vld [vmem:[%s1044 + $0x32] sm:$0xff]
  %v1740 = vld [vmem:[%s1044 + $0x3a] sm:$0xff]
  %v1741 = vld [vmem:[%s1044 + $0x4a] sm:$0xff]
  %v1742 = vld [vmem:[%s1044 + $0x52] sm:$0xff]
  %v1743 = vld [vmem:[%s1044 + $0x62] sm:$0xff]
  %v1744 = vld [vmem:[%s1044 + $0x6a] sm:$0xff]
  %v1745 = vld [vmem:[%s1044 + $0x7a] sm:$0xff]
  %v1746 = vld [vmem:[%s1044 + $0x82] sm:$0xff]
  %v1747 = vld [vmem:[%s1044 + $0x92] sm:$0xff]
  %v1748 = vld [vmem:[%s1044 + $0x9a] sm:$0xff]
  %v1749 = vld [vmem:[%s1044 + $0xaa] sm:$0xff]
  %v1750 = vld [vmem:[%s1044 + $0xb2] sm:$0xff]
  %v1751 = vld [vmem:[%s1044 + $0xc2] sm:$0xff]
  %v1752 = vld [vmem:[%s1044 + $0xca] sm:$0xff]
  %v1753 = vld [vmem:[%s1044 + $0xda] sm:$0xff]
  %v1754 = vld [vmem:[%s1044 + $0xe2] sm:$0xff]
  %v1755 = vld [vmem:[%s1044 + $0xf2] sm:$0xff]
  %v1756 = vld [vmem:[%s1044 + $0xfa] sm:$0xff]
  %v1757 = vld [vmem:[%s1044 + $0x10a] sm:$0xff]
  %v1758 = vld [vmem:[%s1044 + $0x112] sm:$0xff]
  %v1759 = vld [vmem:[%s1044 + $0x122] sm:$0xff]
  %v1760 = vld [vmem:[%s1044 + $0x12a] sm:$0xff]
  %v1761 = vld [vmem:[%s1044 + $0x13a] sm:$0xff]
  %v1762 = vld [vmem:[%s1044 + $0x142] sm:$0xff]
  %v1763 = vld [vmem:[%s1044 + $0x152] sm:$0xff]
  %v1764 = vld [vmem:[%s1044 + $0x15a] sm:$0xff]
  %v1765 = vld [vmem:[%s1044 + $0x16a] sm:$0xff]
  %v1766 = vld [vmem:[%s1044 + $0x172] sm:$0xff]
  %v1767 = vld [vmem:[%s1044 + $0x1b2] sm:$0xff]
  %v1768 = vld [vmem:[%s1044 + $0x1ba] sm:$0xff]
  %v1769 = vld [vmem:[%s1044 + $0x1ca] sm:$0xff]
  %v1770 = vld [vmem:[%s1044 + $0x1d2] sm:$0xff]
  %v1771 = vld [vmem:[%s1044 + $0x1e2] sm:$0xff]
  %v1772 = vld [vmem:[%s1044 + $0x1ea] sm:$0xff]
  %v1773 = vld [vmem:[%s1044 + $0x1fa] sm:$0xff]
  %v1774 = vld [vmem:[%s1044 + $0x202] sm:$0xff]
  %v1775 = vld [vmem:[%s1044 + $0x212] sm:$0xff]
  %v1776 = vld [vmem:[%s1044 + $0x21a] sm:$0xff]
  %v1777 = vld [vmem:[%s1044 + $0x22a] sm:$0xff]
  %v1778 = vld [vmem:[%s1044 + $0x232] sm:$0xff]
  %v1779 = vld [vmem:[%s1044 + $0x242] sm:$0xff]
  %v1780 = vld [vmem:[%s1044 + $0x24a] sm:$0xff]
  %v1781 = vld [vmem:[%s1044 + $0x25a] sm:$0xff]
  %v1782 = vld [vmem:[%s1044 + $0x262] sm:$0xff]
  %v1783 = vld [vmem:[%s1044 + $0x272] sm:$0xff]
  %v1784 = vld [vmem:[%s1044 + $0x27a] sm:$0xff]
  %v1785 = vld [vmem:[%s1044 + $0x28a] sm:$0xff]
  %v1786 = vld [vmem:[%s1044 + $0x292] sm:$0xff]
  %v1787 = vld [vmem:[%s1044 + $0x2a2] sm:$0xff]
  %v1788 = vld [vmem:[%s1044 + $0x2aa] sm:$0xff]
  %v1789 = vld [vmem:[%s1044 + $0x2ba] sm:$0xff]
  %v1790 = vld [vmem:[%s1044 + $0x2c2] sm:$0xff]
  %v1791 = vld [vmem:[%s1044 + $0x2d2] sm:$0xff]
  %v1792 = vld [vmem:[%s1044 + $0x2da] sm:$0xff]
  %v1793 = vld [vmem:[%s1044 + $0x2ea] sm:$0xff]
  %v1794 = vld [vmem:[%s1044 + $0x2f2] sm:$0xff]
  %v1795 = vld [vmem:[%s1044 + $0x302] sm:$0xff]
  %v1796 = vld [vmem:[%s1044 + $0x30a] sm:$0xff]
  %v1797 = vld [vmem:[%s1044 + $0x31a] sm:$0xff]
  %v1798 = vld [vmem:[%s1044 + $0x322] sm:$0xff]
  %s1799 = scalar_lea.vmem %s1, 40
  %v1800 = vld [vmem:[%s1799] sm:$0xff]
  %v1802 = vsel %vm148, %v1800, 0
  %v1805 = vsel %vm148, %v1735, 0
  %v1808 = vsel %vm148, %v1736, 0
  %v1811 = vsel %vm148, %v1737, 0
  %v1814 = vsel %vm148, %v1738, 0
  %v1817 = vsel %vm148, %v1739, 0
  %v1820 = vsel %vm148, %v1740, 0
  %v1823 = vsel %vm148, %v1741, 0
  %v1826 = vsel %vm148, %v1742, 0
  %v1829 = vsel %vm148, %v1743, 0
  %v1832 = vsel %vm148, %v1744, 0
  %v1835 = vsel %vm148, %v1745, 0
  %v1838 = vsel %vm148, %v1746, 0
  %v1841 = vsel %vm148, %v1747, 0
  %v1844 = vsel %vm148, %v1748, 0
  %v1847 = vsel %vm148, %v1749, 0
  %v1850 = vsel %vm148, %v1750, 0
  %v1853 = vsel %vm148, %v1751, 0
  %v1856 = vsel %vm148, %v1752, 0
  %v1859 = vsel %vm148, %v1753, 0
  %v1862 = vsel %vm148, %v1754, 0
  %v1865 = vsel %vm148, %v1755, 0
  %v1868 = vsel %vm148, %v1756, 0
  %v1871 = vsel %vm148, %v1757, 0
  %v1874 = vsel %vm148, %v1758, 0
  %v1877 = vsel %vm148, %v1759, 0
  %v1880 = vsel %vm148, %v1760, 0
  %v1883 = vsel %vm148, %v1761, 0
  %v1886 = vsel %vm148, %v1762, 0
  %v1889 = vsel %vm148, %v1763, 0
  %v1892 = vsel %vm148, %v1764, 0
  %v1895 = vsel %vm148, %v1765, 0
  %v1898 = vsel %vm148, %v1766, 0
  %v1901 = vsel %vm148, %v1767, 0
  %v1904 = vsel %vm148, %v1768, 0
  %v1907 = vsel %vm148, %v1769, 0
  %v1910 = vsel %vm148, %v1770, 0
  %v1913 = vsel %vm148, %v1771, 0
  %v1916 = vsel %vm148, %v1772, 0
  %v1919 = vsel %vm148, %v1773, 0
  %v1922 = vsel %vm148, %v1774, 0
  %v1925 = vsel %vm148, %v1775, 0
  %v1928 = vsel %vm148, %v1776, 0
  %v1931 = vsel %vm148, %v1777, 0
  %v1934 = vsel %vm148, %v1778, 0
  %v1937 = vsel %vm148, %v1779, 0
  %v1940 = vsel %vm148, %v1780, 0
  %v1943 = vsel %vm148, %v1781, 0
  %v1946 = vsel %vm148, %v1782, 0
  %v1949 = vsel %vm148, %v1783, 0
  %v1952 = vsel %vm148, %v1784, 0
  %v1955 = vsel %vm148, %v1785, 0
  %v1958 = vsel %vm148, %v1786, 0
  %v1961 = vsel %vm148, %v1787, 0
  %v1964 = vsel %vm148, %v1788, 0
  %v1967 = vsel %vm148, %v1789, 0
  %v1970 = vsel %vm148, %v1790, 0
  %v1973 = vsel %vm148, %v1791, 0
  %v1976 = vsel %vm148, %v1792, 0
  %v1979 = vsel %vm148, %v1793, 0
  %v1982 = vsel %vm148, %v1794, 0
  %v1985 = vsel %vm148, %v1795, 0
  %v1988 = vsel %vm148, %v1796, 0
  %v1991 = vsel %vm148, %v1797, 0
  %v1994 = vsel %vm148, %v1798, 0
  %1996 = vmatpush.xpose.msra.mxu0 %v1850
  %1997 = vmatpush.xpose.msra.mxu0 %v1847
  %1998 = vmatpush.xpose.msra.mxu0 %v1844
  %1999 = vmatpush.xpose.msra.mxu0 %v1841
  %2000 = vmatpush.xpose.msra.mxu0 %v1838
  %2001 = vmatpush.xpose.msra.mxu0 %v1835
  %2002 = vmatpush.xpose.msra.mxu0 %v1832
  %2003 = vmatpush.xpose.msra.mxu0 %v1829
  %2004 = vmatpush.xpose.msra.mxu0 %v1826
  %2005 = vmatpush.xpose.msra.mxu0 %v1823
  %2006 = vmatpush.xpose.msra.mxu0 %v1820
  %2007 = vmatpush.xpose.msra.mxu0 %v1817
  %2008 = vmatpush.xpose.msra.mxu0 %v1814
  %2009 = vmatpush.xpose.msra.mxu0 %v1811
  %2010 = vmatpush.xpose.msra.mxu0 %v1808
  %2011 = vmatpush.xpose.msra.mxu0 %v1805
  %2012 = vmatmul.f32.gmra.mxu0 %v1802
  %v2013 = vpop.f32.mrf.mxu0
  %v2014 = vadd.f32 0.0, %v2013
  %2015 = vdwg.mxu0
  %2016 = vmatpush.xpose.msra.mxu0 %v1898
  %2017 = vmatpush.xpose.msra.mxu0 %v1895
  %2018 = vmatpush.xpose.msra.mxu0 %v1892
  %2019 = vmatpush.xpose.msra.mxu0 %v1889
  %2020 = vmatpush.xpose.msra.mxu0 %v1886
  %2021 = vmatpush.xpose.msra.mxu0 %v1883
  %2022 = vmatpush.xpose.msra.mxu0 %v1880
  %2023 = vmatpush.xpose.msra.mxu0 %v1877
  %2024 = vmatpush.xpose.msra.mxu0 %v1874
  %2025 = vmatpush.xpose.msra.mxu0 %v1871
  %2026 = vmatpush.xpose.msra.mxu0 %v1868
  %2027 = vmatpush.xpose.msra.mxu0 %v1865
  %2028 = vmatpush.xpose.msra.mxu0 %v1862
  %2029 = vmatpush.xpose.msra.mxu0 %v1859
  %2030 = vmatpush.xpose.msra.mxu0 %v1856
  %2031 = vmatpush.xpose.msra.mxu0 %v1853
  %2032 = vmatmul.f32.gmra.mxu0 %v1802
  %v2033 = vpop.f32.mrf.mxu0
  %v2034 = vadd.f32 0.0, %v2033
  %2035 = vdwg.mxu0
  %2036 = vmatpush.xpose.msra.mxu0 %v1946
  %2037 = vmatpush.xpose.msra.mxu0 %v1943
  %2038 = vmatpush.xpose.msra.mxu0 %v1940
  %2039 = vmatpush.xpose.msra.mxu0 %v1937
  %2040 = vmatpush.xpose.msra.mxu0 %v1934
  %2041 = vmatpush.xpose.msra.mxu0 %v1931
  %2042 = vmatpush.xpose.msra.mxu0 %v1928
  %2043 = vmatpush.xpose.msra.mxu0 %v1925
  %2044 = vmatpush.xpose.msra.mxu0 %v1922
  %2045 = vmatpush.xpose.msra.mxu0 %v1919
  %2046 = vmatpush.xpose.msra.mxu0 %v1916
  %2047 = vmatpush.xpose.msra.mxu0 %v1913
  %2048 = vmatpush.xpose.msra.mxu0 %v1910
  %2049 = vmatpush.xpose.msra.mxu0 %v1907
  %2050 = vmatpush.xpose.msra.mxu0 %v1904
  %2051 = vmatpush.xpose.msra.mxu0 %v1901
  %2052 = vmatmul.f32.gmra.mxu0 %v1802
  %v2053 = vpop.f32.mrf.mxu0
  %v2054 = vadd.f32 0.0, %v2053
  %2055 = vdwg.mxu0
  %2056 = vmatpush.xpose.msra.mxu0 %v1994
  %2057 = vmatpush.xpose.msra.mxu0 %v1991
  %2058 = vmatpush.xpose.msra.mxu0 %v1988
  %2059 = vmatpush.xpose.msra.mxu0 %v1985
  %2060 = vmatpush.xpose.msra.mxu0 %v1982
  %2061 = vmatpush.xpose.msra.mxu0 %v1979
  %2062 = vmatpush.xpose.msra.mxu0 %v1976
  %2063 = vmatpush.xpose.msra.mxu0 %v1973
  %2064 = vmatpush.xpose.msra.mxu0 %v1970
  %2065 = vmatpush.xpose.msra.mxu0 %v1967
  %2066 = vmatpush.xpose.msra.mxu0 %v1964
  %2067 = vmatpush.xpose.msra.mxu0 %v1961
  %2068 = vmatpush.xpose.msra.mxu0 %v1958
  %2069 = vmatpush.xpose.msra.mxu0 %v1955
  %2070 = vmatpush.xpose.msra.mxu0 %v1952
  %2071 = vmatpush.xpose.msra.mxu0 %v1949
  %2072 = vmatmul.f32.gmra.mxu0 %v1802
  %v2073 = vpop.f32.mrf.mxu0
  %v2074 = vadd.f32 0.0, %v2073
  %2075 = vdwg.mxu0
  %v2076 = vadd.f32 %v1731, %v2014
  %v2077 = vadd.f32 %v1732, %v2034
  %v2078 = vadd.f32 %v1733, %v2054
  %v2079 = vadd.f32 %v1734, %v2074
  %s2080 = scalar_lea.vmem %s0, 48
  %v2081 = vld [vmem:[%s2080] sm:$0xff]
  %v2082 = vld [vmem:[%s2080 + $0x8] sm:$0xff]
  %v2083 = vld [vmem:[%s2080 + $0x18] sm:$0xff]
  %v2084 = vld [vmem:[%s2080 + $0x20] sm:$0xff]
  %v2085 = vld [vmem:[%s2080 + $0x30] sm:$0xff]
  %v2086 = vld [vmem:[%s2080 + $0x38] sm:$0xff]
  %v2087 = vld [vmem:[%s2080 + $0x48] sm:$0xff]
  %v2088 = vld [vmem:[%s2080 + $0x50] sm:$0xff]
  %v2089 = vld [vmem:[%s2080 + $0x60] sm:$0xff]
  %v2090 = vld [vmem:[%s2080 + $0x68] sm:$0xff]
  %v2091 = vld [vmem:[%s2080 + $0x78] sm:$0xff]
  %v2092 = vld [vmem:[%s2080 + $0x80] sm:$0xff]
  %v2093 = vld [vmem:[%s2080 + $0x90] sm:$0xff]
  %v2094 = vld [vmem:[%s2080 + $0x98] sm:$0xff]
  %v2095 = vld [vmem:[%s2080 + $0xa8] sm:$0xff]
  %v2096 = vld [vmem:[%s2080 + $0xb0] sm:$0xff]
  %v2097 = vld [vmem:[%s2080 + $0xc0] sm:$0xff]
  %v2098 = vld [vmem:[%s2080 + $0xc8] sm:$0xff]
  %v2099 = vld [vmem:[%s2080 + $0xd8] sm:$0xff]
  %v2100 = vld [vmem:[%s2080 + $0xe0] sm:$0xff]
  %v2101 = vld [vmem:[%s2080 + $0xf0] sm:$0xff]
  %v2102 = vld [vmem:[%s2080 + $0xf8] sm:$0xff]
  %v2103 = vld [vmem:[%s2080 + $0x108] sm:$0xff]
  %v2104 = vld [vmem:[%s2080 + $0x110] sm:$0xff]
  %v2105 = vld [vmem:[%s2080 + $0x120] sm:$0xff]
  %v2106 = vld [vmem:[%s2080 + $0x128] sm:$0xff]
  %v2107 = vld [vmem:[%s2080 + $0x138] sm:$0xff]
  %v2108 = vld [vmem:[%s2080 + $0x140] sm:$0xff]
  %v2109 = vld [vmem:[%s2080 + $0x150] sm:$0xff]
  %v2110 = vld [vmem:[%s2080 + $0x158] sm:$0xff]
  %v2111 = vld [vmem:[%s2080 + $0x168] sm:$0xff]
  %v2112 = vld [vmem:[%s2080 + $0x170] sm:$0xff]
  %v2113 = vld [vmem:[%s2080 + $0x1b0] sm:$0xff]
  %v2114 = vld [vmem:[%s2080 + $0x1b8] sm:$0xff]
  %v2115 = vld [vmem:[%s2080 + $0x1c8] sm:$0xff]
  %v2116 = vld [vmem:[%s2080 + $0x1d0] sm:$0xff]
  %v2117 = vld [vmem:[%s2080 + $0x1e0] sm:$0xff]
  %v2118 = vld [vmem:[%s2080 + $0x1e8] sm:$0xff]
  %v2119 = vld [vmem:[%s2080 + $0x1f8] sm:$0xff]
  %v2120 = vld [vmem:[%s2080 + $0x200] sm:$0xff]
  %v2121 = vld [vmem:[%s2080 + $0x210] sm:$0xff]
  %v2122 = vld [vmem:[%s2080 + $0x218] sm:$0xff]
  %v2123 = vld [vmem:[%s2080 + $0x228] sm:$0xff]
  %v2124 = vld [vmem:[%s2080 + $0x230] sm:$0xff]
  %v2125 = vld [vmem:[%s2080 + $0x240] sm:$0xff]
  %v2126 = vld [vmem:[%s2080 + $0x248] sm:$0xff]
  %v2127 = vld [vmem:[%s2080 + $0x258] sm:$0xff]
  %v2128 = vld [vmem:[%s2080 + $0x260] sm:$0xff]
  %v2129 = vld [vmem:[%s2080 + $0x270] sm:$0xff]
  %v2130 = vld [vmem:[%s2080 + $0x278] sm:$0xff]
  %v2131 = vld [vmem:[%s2080 + $0x288] sm:$0xff]
  %v2132 = vld [vmem:[%s2080 + $0x290] sm:$0xff]
  %v2133 = vld [vmem:[%s2080 + $0x2a0] sm:$0xff]
  %v2134 = vld [vmem:[%s2080 + $0x2a8] sm:$0xff]
  %v2135 = vld [vmem:[%s2080 + $0x2b8] sm:$0xff]
  %v2136 = vld [vmem:[%s2080 + $0x2c0] sm:$0xff]
  %v2137 = vld [vmem:[%s2080 + $0x2d0] sm:$0xff]
  %v2138 = vld [vmem:[%s2080 + $0x2d8] sm:$0xff]
  %v2139 = vld [vmem:[%s2080 + $0x2e8] sm:$0xff]
  %v2140 = vld [vmem:[%s2080 + $0x2f0] sm:$0xff]
  %v2141 = vld [vmem:[%s2080 + $0x300] sm:$0xff]
  %v2142 = vld [vmem:[%s2080 + $0x308] sm:$0xff]
  %v2143 = vld [vmem:[%s2080 + $0x318] sm:$0xff]
  %v2144 = vld [vmem:[%s2080 + $0x320] sm:$0xff]
  %s2145 = scalar_lea.vmem %s1, 48
  %v2146 = vld [vmem:[%s2145] sm:$0xff]
  %v2148 = vsel %vm148, %v2146, 0
  %v2151 = vsel %vm148, %v2081, 0
  %v2154 = vsel %vm148, %v2082, 0
  %v2157 = vsel %vm148, %v2083, 0
  %v2160 = vsel %vm148, %v2084, 0
  %v2163 = vsel %vm148, %v2085, 0
  %v2166 = vsel %vm148, %v2086, 0
  %v2169 = vsel %vm148, %v2087, 0
  %v2172 = vsel %vm148, %v2088, 0
  %v2175 = vsel %vm148, %v2089, 0
  %v2178 = vsel %vm148, %v2090, 0
  %v2181 = vsel %vm148, %v2091, 0
  %v2184 = vsel %vm148, %v2092, 0
  %v2187 = vsel %vm148, %v2093, 0
  %v2190 = vsel %vm148, %v2094, 0
  %v2193 = vsel %vm148, %v2095, 0
  %v2196 = vsel %vm148, %v2096, 0
  %v2199 = vsel %vm148, %v2097, 0
  %v2202 = vsel %vm148, %v2098, 0
  %v2205 = vsel %vm148, %v2099, 0
  %v2208 = vsel %vm148, %v2100, 0
  %v2211 = vsel %vm148, %v2101, 0
  %v2214 = vsel %vm148, %v2102, 0
  %v2217 = vsel %vm148, %v2103, 0
  %v2220 = vsel %vm148, %v2104, 0
  %v2223 = vsel %vm148, %v2105, 0
  %v2226 = vsel %vm148, %v2106, 0
  %v2229 = vsel %vm148, %v2107, 0
  %v2232 = vsel %vm148, %v2108, 0
  %v2235 = vsel %vm148, %v2109, 0
  %v2238 = vsel %vm148, %v2110, 0
  %v2241 = vsel %vm148, %v2111, 0
  %v2244 = vsel %vm148, %v2112, 0
  %v2247 = vsel %vm148, %v2113, 0
  %v2250 = vsel %vm148, %v2114, 0
  %v2253 = vsel %vm148, %v2115, 0
  %v2256 = vsel %vm148, %v2116, 0
  %v2259 = vsel %vm148, %v2117, 0
  %v2262 = vsel %vm148, %v2118, 0
  %v2265 = vsel %vm148, %v2119, 0
  %v2268 = vsel %vm148, %v2120, 0
  %v2271 = vsel %vm148, %v2121, 0
  %v2274 = vsel %vm148, %v2122, 0
  %v2277 = vsel %vm148, %v2123, 0
  %v2280 = vsel %vm148, %v2124, 0
  %v2283 = vsel %vm148, %v2125, 0
  %v2286 = vsel %vm148, %v2126, 0
  %v2289 = vsel %vm148, %v2127, 0
  %v2292 = vsel %vm148, %v2128, 0
  %v2295 = vsel %vm148, %v2129, 0
  %v2298 = vsel %vm148, %v2130, 0
  %v2301 = vsel %vm148, %v2131, 0
  %v2304 = vsel %vm148, %v2132, 0
  %v2307 = vsel %vm148, %v2133, 0
  %v2310 = vsel %vm148, %v2134, 0
  %v2313 = vsel %vm148, %v2135, 0
  %v2316 = vsel %vm148, %v2136, 0
  %v2319 = vsel %vm148, %v2137, 0
  %v2322 = vsel %vm148, %v2138, 0
  %v2325 = vsel %vm148, %v2139, 0
  %v2328 = vsel %vm148, %v2140, 0
  %v2331 = vsel %vm148, %v2141, 0
  %v2334 = vsel %vm148, %v2142, 0
  %v2337 = vsel %vm148, %v2143, 0
  %v2340 = vsel %vm148, %v2144, 0
  %2342 = vmatpush.xpose.msra.mxu0 %v2196
  %2343 = vmatpush.xpose.msra.mxu0 %v2193
  %2344 = vmatpush.xpose.msra.mxu0 %v2190
  %2345 = vmatpush.xpose.msra.mxu0 %v2187
  %2346 = vmatpush.xpose.msra.mxu0 %v2184
  %2347 = vmatpush.xpose.msra.mxu0 %v2181
  %2348 = vmatpush.xpose.msra.mxu0 %v2178
  %2349 = vmatpush.xpose.msra.mxu0 %v2175
  %2350 = vmatpush.xpose.msra.mxu0 %v2172
  %2351 = vmatpush.xpose.msra.mxu0 %v2169
  %2352 = vmatpush.xpose.msra.mxu0 %v2166
  %2353 = vmatpush.xpose.msra.mxu0 %v2163
  %2354 = vmatpush.xpose.msra.mxu0 %v2160
  %2355 = vmatpush.xpose.msra.mxu0 %v2157
  %2356 = vmatpush.xpose.msra.mxu0 %v2154
  %2357 = vmatpush.xpose.msra.mxu0 %v2151
  %2358 = vmatmul.f32.gmra.mxu0 %v2148
  %v2359 = vpop.f32.mrf.mxu0
  %v2360 = vadd.f32 0.0, %v2359
  %2361 = vdwg.mxu0
  %2362 = vmatpush.xpose.msra.mxu0 %v2244
  %2363 = vmatpush.xpose.msra.mxu0 %v2241
  %2364 = vmatpush.xpose.msra.mxu0 %v2238
  %2365 = vmatpush.xpose.msra.mxu0 %v2235
  %2366 = vmatpush.xpose.msra.mxu0 %v2232
  %2367 = vmatpush.xpose.msra.mxu0 %v2229
  %2368 = vmatpush.xpose.msra.mxu0 %v2226
  %2369 = vmatpush.xpose.msra.mxu0 %v2223
  %2370 = vmatpush.xpose.msra.mxu0 %v2220
  %2371 = vmatpush.xpose.msra.mxu0 %v2217
  %2372 = vmatpush.xpose.msra.mxu0 %v2214
  %2373 = vmatpush.xpose.msra.mxu0 %v2211
  %2374 = vmatpush.xpose.msra.mxu0 %v2208
  %2375 = vmatpush.xpose.msra.mxu0 %v2205
  %2376 = vmatpush.xpose.msra.mxu0 %v2202
  %2377 = vmatpush.xpose.msra.mxu0 %v2199
  %2378 = vmatmul.f32.gmra.mxu0 %v2148
  %v2379 = vpop.f32.mrf.mxu0
  %v2380 = vadd.f32 0.0, %v2379
  %2381 = vdwg.mxu0
  %2382 = vmatpush.xpose.msra.mxu0 %v2292
  %2383 = vmatpush.xpose.msra.mxu0 %v2289
  %2384 = vmatpush.xpose.msra.mxu0 %v2286
  %2385 = vmatpush.xpose.msra.mxu0 %v2283
  %2386 = vmatpush.xpose.msra.mxu0 %v2280
  %2387 = vmatpush.xpose.msra.mxu0 %v2277
  %2388 = vmatpush.xpose.msra.mxu0 %v2274
  %2389 = vmatpush.xpose.msra.mxu0 %v2271
  %2390 = vmatpush.xpose.msra.mxu0 %v2268
  %2391 = vmatpush.xpose.msra.mxu0 %v2265
  %2392 = vmatpush.xpose.msra.mxu0 %v2262
  %2393 = vmatpush.xpose.msra.mxu0 %v2259
  %2394 = vmatpush.xpose.msra.mxu0 %v2256
  %2395 = vmatpush.xpose.msra.mxu0 %v2253
  %2396 = vmatpush.xpose.msra.mxu0 %v2250
  %2397 = vmatpush.xpose.msra.mxu0 %v2247
  %2398 = vmatmul.f32.gmra.mxu0 %v2148
  %v2399 = vpop.f32.mrf.mxu0
  %v2400 = vadd.f32 0.0, %v2399
  %2401 = vdwg.mxu0
  %2402 = vmatpush.xpose.msra.mxu0 %v2340
  %2403 = vmatpush.xpose.msra.mxu0 %v2337
  %2404 = vmatpush.xpose.msra.mxu0 %v2334
  %2405 = vmatpush.xpose.msra.mxu0 %v2331
  %2406 = vmatpush.xpose.msra.mxu0 %v2328
  %2407 = vmatpush.xpose.msra.mxu0 %v2325
  %2408 = vmatpush.xpose.msra.mxu0 %v2322
  %2409 = vmatpush.xpose.msra.mxu0 %v2319
  %2410 = vmatpush.xpose.msra.mxu0 %v2316
  %2411 = vmatpush.xpose.msra.mxu0 %v2313
  %2412 = vmatpush.xpose.msra.mxu0 %v2310
  %2413 = vmatpush.xpose.msra.mxu0 %v2307
  %2414 = vmatpush.xpose.msra.mxu0 %v2304
  %2415 = vmatpush.xpose.msra.mxu0 %v2301
  %2416 = vmatpush.xpose.msra.mxu0 %v2298
  %2417 = vmatpush.xpose.msra.mxu0 %v2295
  %2418 = vmatmul.f32.gmra.mxu0 %v2148
  %v2419 = vpop.f32.mrf.mxu0
  %v2420 = vadd.f32 0.0, %v2419
  %2421 = vdwg.mxu0
  %v2422 = vadd.f32 %v2076, %v2360
  %v2423 = vadd.f32 %v2077, %v2380
  %v2424 = vadd.f32 %v2078, %v2400
  %v2425 = vadd.f32 %v2079, %v2420
  %v2426 = vld [vmem:[%s2080 + $0x1] sm:$0xff]
  %v2427 = vld [vmem:[%s2080 + $0x9] sm:$0xff]
  %v2428 = vld [vmem:[%s2080 + $0x19] sm:$0xff]
  %v2429 = vld [vmem:[%s2080 + $0x21] sm:$0xff]
  %v2430 = vld [vmem:[%s2080 + $0x31] sm:$0xff]
  %v2431 = vld [vmem:[%s2080 + $0x39] sm:$0xff]
  %v2432 = vld [vmem:[%s2080 + $0x49] sm:$0xff]
  %v2433 = vld [vmem:[%s2080 + $0x51] sm:$0xff]
  %v2434 = vld [vmem:[%s2080 + $0x61] sm:$0xff]
  %v2435 = vld [vmem:[%s2080 + $0x69] sm:$0xff]
  %v2436 = vld [vmem:[%s2080 + $0x79] sm:$0xff]
  %v2437 = vld [vmem:[%s2080 + $0x81] sm:$0xff]
  %v2438 = vld [vmem:[%s2080 + $0x91] sm:$0xff]
  %v2439 = vld [vmem:[%s2080 + $0x99] sm:$0xff]
  %v2440 = vld [vmem:[%s2080 + $0xa9] sm:$0xff]
  %v2441 = vld [vmem:[%s2080 + $0xb1] sm:$0xff]
  %v2442 = vld [vmem:[%s2080 + $0xc1] sm:$0xff]
  %v2443 = vld [vmem:[%s2080 + $0xc9] sm:$0xff]
  %v2444 = vld [vmem:[%s2080 + $0xd9] sm:$0xff]
  %v2445 = vld [vmem:[%s2080 + $0xe1] sm:$0xff]
  %v2446 = vld [vmem:[%s2080 + $0xf1] sm:$0xff]
  %v2447 = vld [vmem:[%s2080 + $0xf9] sm:$0xff]
  %v2448 = vld [vmem:[%s2080 + $0x109] sm:$0xff]
  %v2449 = vld [vmem:[%s2080 + $0x111] sm:$0xff]
  %v2450 = vld [vmem:[%s2080 + $0x121] sm:$0xff]
  %v2451 = vld [vmem:[%s2080 + $0x129] sm:$0xff]
  %v2452 = vld [vmem:[%s2080 + $0x139] sm:$0xff]
  %v2453 = vld [vmem:[%s2080 + $0x141] sm:$0xff]
  %v2454 = vld [vmem:[%s2080 + $0x151] sm:$0xff]
  %v2455 = vld [vmem:[%s2080 + $0x159] sm:$0xff]
  %v2456 = vld [vmem:[%s2080 + $0x169] sm:$0xff]
  %v2457 = vld [vmem:[%s2080 + $0x171] sm:$0xff]
  %v2458 = vld [vmem:[%s2080 + $0x1b1] sm:$0xff]
  %v2459 = vld [vmem:[%s2080 + $0x1b9] sm:$0xff]
  %v2460 = vld [vmem:[%s2080 + $0x1c9] sm:$0xff]
  %v2461 = vld [vmem:[%s2080 + $0x1d1] sm:$0xff]
  %v2462 = vld [vmem:[%s2080 + $0x1e1] sm:$0xff]
  %v2463 = vld [vmem:[%s2080 + $0x1e9] sm:$0xff]
  %v2464 = vld [vmem:[%s2080 + $0x1f9] sm:$0xff]
  %v2465 = vld [vmem:[%s2080 + $0x201] sm:$0xff]
  %v2466 = vld [vmem:[%s2080 + $0x211] sm:$0xff]
  %v2467 = vld [vmem:[%s2080 + $0x219] sm:$0xff]
  %v2468 = vld [vmem:[%s2080 + $0x229] sm:$0xff]
  %v2469 = vld [vmem:[%s2080 + $0x231] sm:$0xff]
  %v2470 = vld [vmem:[%s2080 + $0x241] sm:$0xff]
  %v2471 = vld [vmem:[%s2080 + $0x249] sm:$0xff]
  %v2472 = vld [vmem:[%s2080 + $0x259] sm:$0xff]
  %v2473 = vld [vmem:[%s2080 + $0x261] sm:$0xff]
  %v2474 = vld [vmem:[%s2080 + $0x271] sm:$0xff]
  %v2475 = vld [vmem:[%s2080 + $0x279] sm:$0xff]
  %v2476 = vld [vmem:[%s2080 + $0x289] sm:$0xff]
  %v2477 = vld [vmem:[%s2080 + $0x291] sm:$0xff]
  %v2478 = vld [vmem:[%s2080 + $0x2a1] sm:$0xff]
  %v2479 = vld [vmem:[%s2080 + $0x2a9] sm:$0xff]
  %v2480 = vld [vmem:[%s2080 + $0x2b9] sm:$0xff]
  %v2481 = vld [vmem:[%s2080 + $0x2c1] sm:$0xff]
  %v2482 = vld [vmem:[%s2080 + $0x2d1] sm:$0xff]
  %v2483 = vld [vmem:[%s2080 + $0x2d9] sm:$0xff]
  %v2484 = vld [vmem:[%s2080 + $0x2e9] sm:$0xff]
  %v2485 = vld [vmem:[%s2080 + $0x2f1] sm:$0xff]
  %v2486 = vld [vmem:[%s2080 + $0x301] sm:$0xff]
  %v2487 = vld [vmem:[%s2080 + $0x309] sm:$0xff]
  %v2488 = vld [vmem:[%s2080 + $0x319] sm:$0xff]
  %v2489 = vld [vmem:[%s2080 + $0x321] sm:$0xff]
  %s2490 = scalar_lea.vmem %s1, 56
  %v2491 = vld [vmem:[%s2490] sm:$0xff]
  %v2493 = vsel %vm148, %v2491, 0
  %v2496 = vsel %vm148, %v2426, 0
  %v2499 = vsel %vm148, %v2427, 0
  %v2502 = vsel %vm148, %v2428, 0
  %v2505 = vsel %vm148, %v2429, 0
  %v2508 = vsel %vm148, %v2430, 0
  %v2511 = vsel %vm148, %v2431, 0
  %v2514 = vsel %vm148, %v2432, 0
  %v2517 = vsel %vm148, %v2433, 0
  %v2520 = vsel %vm148, %v2434, 0
  %v2523 = vsel %vm148, %v2435, 0
  %v2526 = vsel %vm148, %v2436, 0
  %v2529 = vsel %vm148, %v2437, 0
  %v2532 = vsel %vm148, %v2438, 0
  %v2535 = vsel %vm148, %v2439, 0
  %v2538 = vsel %vm148, %v2440, 0
  %v2541 = vsel %vm148, %v2441, 0
  %v2544 = vsel %vm148, %v2442, 0
  %v2547 = vsel %vm148, %v2443, 0
  %v2550 = vsel %vm148, %v2444, 0
  %v2553 = vsel %vm148, %v2445, 0
  %v2556 = vsel %vm148, %v2446, 0
  %v2559 = vsel %vm148, %v2447, 0
  %v2562 = vsel %vm148, %v2448, 0
  %v2565 = vsel %vm148, %v2449, 0
  %v2568 = vsel %vm148, %v2450, 0
  %v2571 = vsel %vm148, %v2451, 0
  %v2574 = vsel %vm148, %v2452, 0
  %v2577 = vsel %vm148, %v2453, 0
  %v2580 = vsel %vm148, %v2454, 0
  %v2583 = vsel %vm148, %v2455, 0
  %v2586 = vsel %vm148, %v2456, 0
  %v2589 = vsel %vm148, %v2457, 0
  %v2592 = vsel %vm148, %v2458, 0
  %v2595 = vsel %vm148, %v2459, 0
  %v2598 = vsel %vm148, %v2460, 0
  %v2601 = vsel %vm148, %v2461, 0
  %v2604 = vsel %vm148, %v2462, 0
  %v2607 = vsel %vm148, %v2463, 0
  %v2610 = vsel %vm148, %v2464, 0
  %v2613 = vsel %vm148, %v2465, 0
  %v2616 = vsel %vm148, %v2466, 0
  %v2619 = vsel %vm148, %v2467, 0
  %v2622 = vsel %vm148, %v2468, 0
  %v2625 = vsel %vm148, %v2469, 0
  %v2628 = vsel %vm148, %v2470, 0
  %v2631 = vsel %vm148, %v2471, 0
  %v2634 = vsel %vm148, %v2472, 0
  %v2637 = vsel %vm148, %v2473, 0
  %v2640 = vsel %vm148, %v2474, 0
  %v2643 = vsel %vm148, %v2475, 0
  %v2646 = vsel %vm148, %v2476, 0
  %v2649 = vsel %vm148, %v2477, 0
  %v2652 = vsel %vm148, %v2478, 0
  %v2655 = vsel %vm148, %v2479, 0
  %v2658 = vsel %vm148, %v2480, 0
  %v2661 = vsel %vm148, %v2481, 0
  %v2664 = vsel %vm148, %v2482, 0
  %v2667 = vsel %vm148, %v2483, 0
  %v2670 = vsel %vm148, %v2484, 0
  %v2673 = vsel %vm148, %v2485, 0
  %v2676 = vsel %vm148, %v2486, 0
  %v2679 = vsel %vm148, %v2487, 0
  %v2682 = vsel %vm148, %v2488, 0
  %v2685 = vsel %vm148, %v2489, 0
  %2687 = vmatpush.xpose.msra.mxu0 %v2541
  %2688 = vmatpush.xpose.msra.mxu0 %v2538
  %2689 = vmatpush.xpose.msra.mxu0 %v2535
  %2690 = vmatpush.xpose.msra.mxu0 %v2532
  %2691 = vmatpush.xpose.msra.mxu0 %v2529
  %2692 = vmatpush.xpose.msra.mxu0 %v2526
  %2693 = vmatpush.xpose.msra.mxu0 %v2523
  %2694 = vmatpush.xpose.msra.mxu0 %v2520
  %2695 = vmatpush.xpose.msra.mxu0 %v2517
  %2696 = vmatpush.xpose.msra.mxu0 %v2514
  %2697 = vmatpush.xpose.msra.mxu0 %v2511
  %2698 = vmatpush.xpose.msra.mxu0 %v2508
  %2699 = vmatpush.xpose.msra.mxu0 %v2505
  %2700 = vmatpush.xpose.msra.mxu0 %v2502
  %2701 = vmatpush.xpose.msra.mxu0 %v2499
  %2702 = vmatpush.xpose.msra.mxu0 %v2496
  %2703 = vmatmul.f32.gmra.mxu0 %v2493
  %v2704 = vpop.f32.mrf.mxu0
  %v2705 = vadd.f32 0.0, %v2704
  %2706 = vdwg.mxu0
  %2707 = vmatpush.xpose.msra.mxu0 %v2589
  %2708 = vmatpush.xpose.msra.mxu0 %v2586
  %2709 = vmatpush.xpose.msra.mxu0 %v2583
  %2710 = vmatpush.xpose.msra.mxu0 %v2580
  %2711 = vmatpush.xpose.msra.mxu0 %v2577
  %2712 = vmatpush.xpose.msra.mxu0 %v2574
  %2713 = vmatpush.xpose.msra.mxu0 %v2571
  %2714 = vmatpush.xpose.msra.mxu0 %v2568
  %2715 = vmatpush.xpose.msra.mxu0 %v2565
  %2716 = vmatpush.xpose.msra.mxu0 %v2562
  %2717 = vmatpush.xpose.msra.mxu0 %v2559
  %2718 = vmatpush.xpose.msra.mxu0 %v2556
  %2719 = vmatpush.xpose.msra.mxu0 %v2553
  %2720 = vmatpush.xpose.msra.mxu0 %v2550
  %2721 = vmatpush.xpose.msra.mxu0 %v2547
  %2722 = vmatpush.xpose.msra.mxu0 %v2544
  %2723 = vmatmul.f32.gmra.mxu0 %v2493
  %v2724 = vpop.f32.mrf.mxu0
  %v2725 = vadd.f32 0.0, %v2724
  %2726 = vdwg.mxu0
  %2727 = vmatpush.xpose.msra.mxu0 %v2637
  %2728 = vmatpush.xpose.msra.mxu0 %v2634
  %2729 = vmatpush.xpose.msra.mxu0 %v2631
  %2730 = vmatpush.xpose.msra.mxu0 %v2628
  %2731 = vmatpush.xpose.msra.mxu0 %v2625
  %2732 = vmatpush.xpose.msra.mxu0 %v2622
  %2733 = vmatpush.xpose.msra.mxu0 %v2619
  %2734 = vmatpush.xpose.msra.mxu0 %v2616
  %2735 = vmatpush.xpose.msra.mxu0 %v2613
  %2736 = vmatpush.xpose.msra.mxu0 %v2610
  %2737 = vmatpush.xpose.msra.mxu0 %v2607
  %2738 = vmatpush.xpose.msra.mxu0 %v2604
  %2739 = vmatpush.xpose.msra.mxu0 %v2601
  %2740 = vmatpush.xpose.msra.mxu0 %v2598
  %2741 = vmatpush.xpose.msra.mxu0 %v2595
  %2742 = vmatpush.xpose.msra.mxu0 %v2592
  %2743 = vmatmul.f32.gmra.mxu0 %v2493
  %v2744 = vpop.f32.mrf.mxu0
  %v2745 = vadd.f32 0.0, %v2744
  %2746 = vdwg.mxu0
  %2747 = vmatpush.xpose.msra.mxu0 %v2685
  %2748 = vmatpush.xpose.msra.mxu0 %v2682
  %2749 = vmatpush.xpose.msra.mxu0 %v2679
  %2750 = vmatpush.xpose.msra.mxu0 %v2676
  %2751 = vmatpush.xpose.msra.mxu0 %v2673
  %2752 = vmatpush.xpose.msra.mxu0 %v2670
  %2753 = vmatpush.xpose.msra.mxu0 %v2667
  %2754 = vmatpush.xpose.msra.mxu0 %v2664
  %2755 = vmatpush.xpose.msra.mxu0 %v2661
  %2756 = vmatpush.xpose.msra.mxu0 %v2658
  %2757 = vmatpush.xpose.msra.mxu0 %v2655
  %2758 = vmatpush.xpose.msra.mxu0 %v2652
  %2759 = vmatpush.xpose.msra.mxu0 %v2649
  %2760 = vmatpush.xpose.msra.mxu0 %v2646
  %2761 = vmatpush.xpose.msra.mxu0 %v2643
  %2762 = vmatpush.xpose.msra.mxu0 %v2640
  %2763 = vmatmul.f32.gmra.mxu0 %v2493
  %v2764 = vpop.f32.mrf.mxu0
  %v2765 = vadd.f32 0.0, %v2764
  %2766 = vdwg.mxu0
  %v2767 = vadd.f32 %v2422, %v2705
  %v2768 = vadd.f32 %v2423, %v2725
  %v2769 = vadd.f32 %v2424, %v2745
  %v2770 = vadd.f32 %v2425, %v2765
  %v2771 = vld [vmem:[%s2080 + $0x2] sm:$0xff]
  %v2772 = vld [vmem:[%s2080 + $0xa] sm:$0xff]
  %v2773 = vld [vmem:[%s2080 + $0x1a] sm:$0xff]
  %v2774 = vld [vmem:[%s2080 + $0x22] sm:$0xff]
  %v2775 = vld [vmem:[%s2080 + $0x32] sm:$0xff]
  %v2776 = vld [vmem:[%s2080 + $0x3a] sm:$0xff]
  %v2777 = vld [vmem:[%s2080 + $0x4a] sm:$0xff]
  %v2778 = vld [vmem:[%s2080 + $0x52] sm:$0xff]
  %v2779 = vld [vmem:[%s2080 + $0x62] sm:$0xff]
  %v2780 = vld [vmem:[%s2080 + $0x6a] sm:$0xff]
  %v2781 = vld [vmem:[%s2080 + $0x7a] sm:$0xff]
  %v2782 = vld [vmem:[%s2080 + $0x82] sm:$0xff]
  %v2783 = vld [vmem:[%s2080 + $0x92] sm:$0xff]
  %v2784 = vld [vmem:[%s2080 + $0x9a] sm:$0xff]
  %v2785 = vld [vmem:[%s2080 + $0xaa] sm:$0xff]
  %v2786 = vld [vmem:[%s2080 + $0xb2] sm:$0xff]
  %v2787 = vld [vmem:[%s2080 + $0xc2] sm:$0xff]
  %v2788 = vld [vmem:[%s2080 + $0xca] sm:$0xff]
  %v2789 = vld [vmem:[%s2080 + $0xda] sm:$0xff]
  %v2790 = vld [vmem:[%s2080 + $0xe2] sm:$0xff]
  %v2791 = vld [vmem:[%s2080 + $0xf2] sm:$0xff]
  %v2792 = vld [vmem:[%s2080 + $0xfa] sm:$0xff]
  %v2793 = vld [vmem:[%s2080 + $0x10a] sm:$0xff]
  %v2794 = vld [vmem:[%s2080 + $0x112] sm:$0xff]
  %v2795 = vld [vmem:[%s2080 + $0x122] sm:$0xff]
  %v2796 = vld [vmem:[%s2080 + $0x12a] sm:$0xff]
  %v2797 = vld [vmem:[%s2080 + $0x13a] sm:$0xff]
  %v2798 = vld [vmem:[%s2080 + $0x142] sm:$0xff]
  %v2799 = vld [vmem:[%s2080 + $0x152] sm:$0xff]
  %v2800 = vld [vmem:[%s2080 + $0x15a] sm:$0xff]
  %v2801 = vld [vmem:[%s2080 + $0x16a] sm:$0xff]
  %v2802 = vld [vmem:[%s2080 + $0x172] sm:$0xff]
  %v2803 = vld [vmem:[%s2080 + $0x1b2] sm:$0xff]
  %v2804 = vld [vmem:[%s2080 + $0x1ba] sm:$0xff]
  %v2805 = vld [vmem:[%s2080 + $0x1ca] sm:$0xff]
  %v2806 = vld [vmem:[%s2080 + $0x1d2] sm:$0xff]
  %v2807 = vld [vmem:[%s2080 + $0x1e2] sm:$0xff]
  %v2808 = vld [vmem:[%s2080 + $0x1ea] sm:$0xff]
  %v2809 = vld [vmem:[%s2080 + $0x1fa] sm:$0xff]
  %v2810 = vld [vmem:[%s2080 + $0x202] sm:$0xff]
  %v2811 = vld [vmem:[%s2080 + $0x212] sm:$0xff]
  %v2812 = vld [vmem:[%s2080 + $0x21a] sm:$0xff]
  %v2813 = vld [vmem:[%s2080 + $0x22a] sm:$0xff]
  %v2814 = vld [vmem:[%s2080 + $0x232] sm:$0xff]
  %v2815 = vld [vmem:[%s2080 + $0x242] sm:$0xff]
  %v2816 = vld [vmem:[%s2080 + $0x24a] sm:$0xff]
  %v2817 = vld [vmem:[%s2080 + $0x25a] sm:$0xff]
  %v2818 = vld [vmem:[%s2080 + $0x262] sm:$0xff]
  %v2819 = vld [vmem:[%s2080 + $0x272] sm:$0xff]
  %v2820 = vld [vmem:[%s2080 + $0x27a] sm:$0xff]
  %v2821 = vld [vmem:[%s2080 + $0x28a] sm:$0xff]
  %v2822 = vld [vmem:[%s2080 + $0x292] sm:$0xff]
  %v2823 = vld [vmem:[%s2080 + $0x2a2] sm:$0xff]
  %v2824 = vld [vmem:[%s2080 + $0x2aa] sm:$0xff]
  %v2825 = vld [vmem:[%s2080 + $0x2ba] sm:$0xff]
  %v2826 = vld [vmem:[%s2080 + $0x2c2] sm:$0xff]
  %v2827 = vld [vmem:[%s2080 + $0x2d2] sm:$0xff]
  %v2828 = vld [vmem:[%s2080 + $0x2da] sm:$0xff]
  %v2829 = vld [vmem:[%s2080 + $0x2ea] sm:$0xff]
  %v2830 = vld [vmem:[%s2080 + $0x2f2] sm:$0xff]
  %v2831 = vld [vmem:[%s2080 + $0x302] sm:$0xff]
  %v2832 = vld [vmem:[%s2080 + $0x30a] sm:$0xff]
  %v2833 = vld [vmem:[%s2080 + $0x31a] sm:$0xff]
  %v2834 = vld [vmem:[%s2080 + $0x322] sm:$0xff]
  %s2835 = scalar_lea.vmem %s1, 64
  %v2836 = vld [vmem:[%s2835] sm:$0xff]
  %v2838 = vsel %vm148, %v2836, 0
  %v2841 = vsel %vm148, %v2771, 0
  %v2844 = vsel %vm148, %v2772, 0
  %v2847 = vsel %vm148, %v2773, 0
  %v2850 = vsel %vm148, %v2774, 0
  %v2853 = vsel %vm148, %v2775, 0
  %v2856 = vsel %vm148, %v2776, 0
  %v2859 = vsel %vm148, %v2777, 0
  %v2862 = vsel %vm148, %v2778, 0
  %v2865 = vsel %vm148, %v2779, 0
  %v2868 = vsel %vm148, %v2780, 0
  %v2871 = vsel %vm148, %v2781, 0
  %v2874 = vsel %vm148, %v2782, 0
  %v2877 = vsel %vm148, %v2783, 0
  %v2880 = vsel %vm148, %v2784, 0
  %v2883 = vsel %vm148, %v2785, 0
  %v2886 = vsel %vm148, %v2786, 0
  %v2889 = vsel %vm148, %v2787, 0
  %v2892 = vsel %vm148, %v2788, 0
  %v2895 = vsel %vm148, %v2789, 0
  %v2898 = vsel %vm148, %v2790, 0
  %v2901 = vsel %vm148, %v2791, 0
  %v2904 = vsel %vm148, %v2792, 0
  %v2907 = vsel %vm148, %v2793, 0
  %v2910 = vsel %vm148, %v2794, 0
  %v2913 = vsel %vm148, %v2795, 0
  %v2916 = vsel %vm148, %v2796, 0
  %v2919 = vsel %vm148, %v2797, 0
  %v2922 = vsel %vm148, %v2798, 0
  %v2925 = vsel %vm148, %v2799, 0
  %v2928 = vsel %vm148, %v2800, 0
  %v2931 = vsel %vm148, %v2801, 0
  %v2934 = vsel %vm148, %v2802, 0
  %v2937 = vsel %vm148, %v2803, 0
  %v2940 = vsel %vm148, %v2804, 0
  %v2943 = vsel %vm148, %v2805, 0
  %v2946 = vsel %vm148, %v2806, 0
  %v2949 = vsel %vm148, %v2807, 0
  %v2952 = vsel %vm148, %v2808, 0
  %v2955 = vsel %vm148, %v2809, 0
  %v2958 = vsel %vm148, %v2810, 0
  %v2961 = vsel %vm148, %v2811, 0
  %v2964 = vsel %vm148, %v2812, 0
  %v2967 = vsel %vm148, %v2813, 0
  %v2970 = vsel %vm148, %v2814, 0
  %v2973 = vsel %vm148, %v2815, 0
  %v2976 = vsel %vm148, %v2816, 0
  %v2979 = vsel %vm148, %v2817, 0
  %v2982 = vsel %vm148, %v2818, 0
  %v2985 = vsel %vm148, %v2819, 0
  %v2988 = vsel %vm148, %v2820, 0
  %v2991 = vsel %vm148, %v2821, 0
  %v2994 = vsel %vm148, %v2822, 0
  %v2997 = vsel %vm148, %v2823, 0
  %v3000 = vsel %vm148, %v2824, 0
  %v3003 = vsel %vm148, %v2825, 0
  %v3006 = vsel %vm148, %v2826, 0
  %v3009 = vsel %vm148, %v2827, 0
  %v3012 = vsel %vm148, %v2828, 0
  %v3015 = vsel %vm148, %v2829, 0
  %v3018 = vsel %vm148, %v2830, 0
  %v3021 = vsel %vm148, %v2831, 0
  %v3024 = vsel %vm148, %v2832, 0
  %v3027 = vsel %vm148, %v2833, 0
  %v3030 = vsel %vm148, %v2834, 0
  %3032 = vmatpush.xpose.msra.mxu0 %v2886
  %3033 = vmatpush.xpose.msra.mxu0 %v2883
  %3034 = vmatpush.xpose.msra.mxu0 %v2880
  %3035 = vmatpush.xpose.msra.mxu0 %v2877
  %3036 = vmatpush.xpose.msra.mxu0 %v2874
  %3037 = vmatpush.xpose.msra.mxu0 %v2871
  %3038 = vmatpush.xpose.msra.mxu0 %v2868
  %3039 = vmatpush.xpose.msra.mxu0 %v2865
  %3040 = vmatpush.xpose.msra.mxu0 %v2862
  %3041 = vmatpush.xpose.msra.mxu0 %v2859
  %3042 = vmatpush.xpose.msra.mxu0 %v2856
  %3043 = vmatpush.xpose.msra.mxu0 %v2853
  %3044 = vmatpush.xpose.msra.mxu0 %v2850
  %3045 = vmatpush.xpose.msra.mxu0 %v2847
  %3046 = vmatpush.xpose.msra.mxu0 %v2844
  %3047 = vmatpush.xpose.msra.mxu0 %v2841
  %3048 = vmatmul.f32.gmra.mxu0 %v2838
  %v3049 = vpop.f32.mrf.mxu0
  %v3050 = vadd.f32 0.0, %v3049
  %3051 = vdwg.mxu0
  %3052 = vmatpush.xpose.msra.mxu0 %v2934
  %3053 = vmatpush.xpose.msra.mxu0 %v2931
  %3054 = vmatpush.xpose.msra.mxu0 %v2928
  %3055 = vmatpush.xpose.msra.mxu0 %v2925
  %3056 = vmatpush.xpose.msra.mxu0 %v2922
  %3057 = vmatpush.xpose.msra.mxu0 %v2919
  %3058 = vmatpush.xpose.msra.mxu0 %v2916
  %3059 = vmatpush.xpose.msra.mxu0 %v2913
  %3060 = vmatpush.xpose.msra.mxu0 %v2910
  %3061 = vmatpush.xpose.msra.mxu0 %v2907
  %3062 = vmatpush.xpose.msra.mxu0 %v2904
  %3063 = vmatpush.xpose.msra.mxu0 %v2901
  %3064 = vmatpush.xpose.msra.mxu0 %v2898
  %3065 = vmatpush.xpose.msra.mxu0 %v2895
  %3066 = vmatpush.xpose.msra.mxu0 %v2892
  %3067 = vmatpush.xpose.msra.mxu0 %v2889
  %3068 = vmatmul.f32.gmra.mxu0 %v2838
  %v3069 = vpop.f32.mrf.mxu0
  %v3070 = vadd.f32 0.0, %v3069
  %3071 = vdwg.mxu0
  %3072 = vmatpush.xpose.msra.mxu0 %v2982
  %3073 = vmatpush.xpose.msra.mxu0 %v2979
  %3074 = vmatpush.xpose.msra.mxu0 %v2976
  %3075 = vmatpush.xpose.msra.mxu0 %v2973
  %3076 = vmatpush.xpose.msra.mxu0 %v2970
  %3077 = vmatpush.xpose.msra.mxu0 %v2967
  %3078 = vmatpush.xpose.msra.mxu0 %v2964
  %3079 = vmatpush.xpose.msra.mxu0 %v2961
  %3080 = vmatpush.xpose.msra.mxu0 %v2958
  %3081 = vmatpush.xpose.msra.mxu0 %v2955
  %3082 = vmatpush.xpose.msra.mxu0 %v2952
  %3083 = vmatpush.xpose.msra.mxu0 %v2949
  %3084 = vmatpush.xpose.msra.mxu0 %v2946
  %3085 = vmatpush.xpose.msra.mxu0 %v2943
  %3086 = vmatpush.xpose.msra.mxu0 %v2940
  %3087 = vmatpush.xpose.msra.mxu0 %v2937
  %3088 = vmatmul.f32.gmra.mxu0 %v2838
  %v3089 = vpop.f32.mrf.mxu0
  %v3090 = vadd.f32 0.0, %v3089
  %3091 = vdwg.mxu0
  %3092 = vmatpush.xpose.msra.mxu0 %v3030
  %3093 = vmatpush.xpose.msra.mxu0 %v3027
  %3094 = vmatpush.xpose.msra.mxu0 %v3024
  %3095 = vmatpush.xpose.msra.mxu0 %v3021
  %3096 = vmatpush.xpose.msra.mxu0 %v3018
  %3097 = vmatpush.xpose.msra.mxu0 %v3015
  %3098 = vmatpush.xpose.msra.mxu0 %v3012
  %3099 = vmatpush.xpose.msra.mxu0 %v3009
  %3100 = vmatpush.xpose.msra.mxu0 %v3006
  %3101 = vmatpush.xpose.msra.mxu0 %v3003
  %3102 = vmatpush.xpose.msra.mxu0 %v3000
  %3103 = vmatpush.xpose.msra.mxu0 %v2997
  %3104 = vmatpush.xpose.msra.mxu0 %v2994
  %3105 = vmatpush.xpose.msra.mxu0 %v2991
  %3106 = vmatpush.xpose.msra.mxu0 %v2988
  %3107 = vmatpush.xpose.msra.mxu0 %v2985
  %3108 = vmatmul.f32.gmra.mxu0 %v2838
  %v3109 = vpop.f32.mrf.mxu0
  %v3110 = vadd.f32 0.0, %v3109
  %3111 = vdwg.mxu0
  %v3112 = vadd.f32 %v2767, %v3050
  %v3113 = vadd.f32 %v2768, %v3070
  %v3114 = vadd.f32 %v2769, %v3090
  %v3115 = vadd.f32 %v2770, %v3110
  %v3116 = vadd.f32 %v3112, %v3113
  %v3117 = vadd.f32 %v3116, %v3114
  %v3118 = vadd.f32 %v3117, %v3115
  %3119 = vadd.xlane.f32.xlu0 %v3118
  %v3120 = vpop.xlane.xlu0 %3119
  %v3121 = vmul.f32 %v3120, 0.001953125
  %v3122 = vsub.f32 %v3112, %v3121
  %v3123 = vsub.f32 %v3113, %v3121
  %v3124 = vsub.f32 %v3114, %v3121
  %v3125 = vsub.f32 %v3115, %v3121
  %v3126 = vmul.f32 %v3122, %v3122
  %v3127 = vmul.f32 %v3123, %v3123
  %v3128 = vmul.f32 %v3124, %v3124
  %v3129 = vmul.f32 %v3125, %v3125
  %v3130 = vadd.f32 %v3126, %v3127
  %v3131 = vadd.f32 %v3130, %v3128
  %v3132 = vadd.f32 %v3131, %v3129
  %3133 = vadd.xlane.f32.xlu0 %v3132
  %v3134 = vpop.xlane.xlu0 %3133
  %v3135 = vmul.f32 %v3134, 0.001953125
  %v3136 = vadd.f32 %v3135, 0.0001
  %v3137 = vrsqrt.pop %v3136
  %v3138 = vmul.f32 %v3137, %v3136
  %v3139 = vmul.f32 %v3138, %v3137
  %v3140 = vmul.f32 0.5, %v3139
  %v3141 = vsub.f32 1.5, %v3140
  %v3142 = vmul.f32 %v3137, %v3141
  %vm3143 = vweird.f32 %v3136
  %vm3144 = vweird.f32 %v3137
  %vm3145 = vmor %vm3143, %vm3144
  %v3146 = vsel %vm3145, %v3137, %v3142
  %v3147 = vld [vmem:[%s2] sm:$0xff]
  %v3148 = vmul.f32 %v3147, %v3146
  %3150 = vset.pattern.permute.xlu0 0
  %3151 = vperm.xlu0 %3150, %v3148
  %v3152 = vpop.permute.xlu0 %3151
  %v3154 = vmul.f32 %v3122, %v3152
  %v3155 = vmul.f32 %v3123, %v3152
  %v3156 = vmul.f32 %v3124, %v3152
  %v3157 = vmul.f32 %v3125, %v3152
  %v3158 = vld [vmem:[%s3] sm:$0xff]
  %3160 = vset.pattern.permute.xlu0 0
  %3161 = vperm.xlu0 %3160, %v3158
  %v3162 = vpop.permute.xlu0 %3161
  %v3164 = vadd.f32 %v3154, %v3162
  %v3165 = vadd.f32 %v3155, %v3162
  %v3166 = vadd.f32 %v3156, %v3162
  %v3167 = vadd.f32 %v3157, %v3162
  %v3168 = vmax.f32 %v3164, 0.0
  %v3169 = vmax.f32 %v3165, 0.0
  %v3170 = vmax.f32 %v3166, 0.0
  %v3171 = vmax.f32 %v3167, 0.0
  %3172 = vst [vmem:[%s4] sm:$0xff] %v3168
  %3173 = vst [vmem:[%s4 + $0x8] sm:$0xff] %v3169
  %s3174 = scalar_lea.vmem %s4, 16
  %3175 = vst [vmem:[%s3174] sm:$0xff] %v3170
  %3176 = vst [vmem:[%s3174 + $0x8] sm:$0xff] %v3171
  // Predicated region
  $region18: #{_lambda_.1} parent=0 // pred_check
    _
  $region19: #{_lambda_.1} parent=0 // pred_check_branch
    %3178 = sbr.rel (0) target = $region21
  $region20: #{_lambda_.1} parent=0 // pred_region
    _
  $region21: #{_lambda_.1} parent=0 // pred_fallthru
    _
  // Predicated region
  $region22: #{_lambda_.1} parent=0 // pred_check
    _
  $region23: #{_lambda_.1} parent=0 // pred_check_branch
    %3180 = sbr.rel (0) target = $region25
  $region24: #{_lambda_.1} parent=0 // pred_region
    _
  $region25: #{_lambda_.1} parent=0 // pred_fallthru
    _

</llo_original>
